<compile_context>
chip_gen: v7x
topology: tpu7x:2x2x1
jax: 0.10.0
libtpu: 0.0.40
codegen_flags: <defaults>
</compile_context>

<pallas_src>
import functools
import math

import jax
import jax.numpy as jnp
from jax.experimental import pallas as pl
from jax.experimental.pallas import tpu as pltpu


def _round_up(x, m):
    return (x + m - 1) // m * m


# ---------------------------------------------------------------------------
# Per-generation policy (queried once at import time).
# ---------------------------------------------------------------------------
def _chip_policy():
    kind = ""
    try:
        kind = jax.devices()[0].device_kind.lower()
    except Exception:
        pass
    if "v7" in kind:
        # 64 MiB VMEM / TensorCore, 2 TCs/chip, 256x256 MXU.
        return dict(name="v7x", vmem_cap=64 << 20, scoped_default=32 << 20,
                    vmem_limit_cap=48 << 20, feat_mult=256,
                    tm_cap=256, th_cap=512, resident_budget=44 << 20,
                    want_even_m_tiles=True)
    if "v6" in kind:
        # 128 MiB VMEM, 256x256 MXU.
        return dict(name="v6e", vmem_cap=128 << 20, scoped_default=32 << 20,
                    vmem_limit_cap=100 << 20, feat_mult=256,
                    tm_cap=512, th_cap=1024, resident_budget=96 << 20,
                    want_even_m_tiles=False)
    if "v5" in kind:
        # v5e: 128 MiB VMEM, 128x128 MXU, 16 MiB scoped-VMEM default.
        return dict(name="v5e", vmem_cap=128 << 20, scoped_default=16 << 20,
                    vmem_limit_cap=100 << 20, feat_mult=128,
                    tm_cap=512, th_cap=1024, resident_budget=96 << 20,
                    want_even_m_tiles=False)
    # Unknown generation: conservative defaults.
    return dict(name="generic", vmem_cap=64 << 20, scoped_default=16 << 20,
                vmem_limit_cap=48 << 20, feat_mult=128,
                tm_cap=256, th_cap=512, resident_budget=40 << 20,
                want_even_m_tiles=False)


_POLICY = _chip_policy()


def _gelu_exact(x):
    # nn.GELU() default = exact erf formulation (strict PyTorch parity).
    return 0.5 * x * (1.0 + jax.lax.erf(x * (1.0 / math.sqrt(2.0))))


# ---------------------------------------------------------------------------
# Kernels
# ---------------------------------------------------------------------------
def _mlp_kernel_resident(x_ref, w1_ref, b1_ref, w2_ref, b2_ref, o_ref, *,
                         precision):
    """1-D grid over token tiles; full weights resident in VMEM."""
    cd = w1_ref.dtype
    x = x_ref[...].astype(cd)                     # in-kernel cast: free VPU work
    h = jnp.dot(x, w1_ref[...], preferred_element_type=jnp.float32,
                precision=precision)
    h = _gelu_exact(h + b1_ref[...])
    y = jnp.dot(h.astype(cd), w2_ref[...], preferred_element_type=jnp.float32,
                precision=precision)
    o_ref[...] = (y + b2_ref[...]).astype(o_ref.dtype)


def _mlp_kernel_tiled(x_ref, w1_ref, b1_ref, w2_ref, b2_ref, o_ref,
                      *maybe_acc, precision):
    """2-D grid (token tiles, hidden reduction tiles) for oversized weights.

    x:(TM,D_in)  w1:(D_in,TH)  b1:(H/TH,TH) resident  w2:(TH,D_out)
    b2:(1,D_out) resident      o:(TM,D_out) resident across the h axis.
    If `maybe_acc` is empty the (f32) output block itself is the accumulator.
    """
    h_idx = pl.program_id(1)
    cd = w1_ref.dtype
    acc_ref = maybe_acc[0] if maybe_acc else o_ref

    @pl.when(h_idx == 0)
    def _():
        # Initialize the accumulator with broadcast b2 -> no finalize add.
        acc_ref[...] = jnp.broadcast_to(b2_ref[...].astype(jnp.float32),
                                        acc_ref.shape)

    x = x_ref[...].astype(cd)
    h = jnp.dot(x, w1_ref[...], preferred_element_type=jnp.float32,
                precision=precision)
    h = _gelu_exact(h + b1_ref[pl.ds(h_idx, 1), :])   # resident b1, per-step row
    acc_ref[...] += jnp.dot(h.astype(cd), w2_ref[...],
                            preferred_element_type=jnp.float32,
                            precision=precision)

    if maybe_acc:
        @pl.when(h_idx == pl.num_programs(1) - 1)
        def _():
            o_ref[...] = acc_ref[...].astype(o_ref.dtype)


# ---------------------------------------------------------------------------
# Forward wrapper (weights already padded / cast by PallasMlp)
# ---------------------------------------------------------------------------
@functools.partial(jax.jit, static_argnames=("d_in", "d_out"))
def _mlp_forward_padded(x, w1p, b1p, w2p, b2p, *, d_in, d_out):
    pol = _POLICY
    orig_shape = x.shape
    out_dtype = x.dtype

    d_in_p, hid_p = w1p.shape
    d_out_p = w2p.shape[1]
    cd = w1p.dtype
    cd_bytes = jnp.dtype(cd).itemsize
    out_bytes = jnp.dtype(out_dtype).itemsize
    # conservative per-element size of the x tile for footprint estimates
    x_bytes = max(jnp.dtype(x.dtype).itemsize, cd_bytes)
    bias_bytes = (hid_p + d_out_p) * 4

    x2d = x.reshape(-1, d_in)
    m = x2d.shape[0]

    precision = (jax.lax.Precision.HIGHEST
                 if cd == jnp.dtype(jnp.float32) else None)

    # ---------------- token tile --------------------------------------------
    tm = min(pol["tm_cap"], _round_up(m, 8))

    # ---------------- path selection: weight-resident vs. tiled -------------
    weights_bytes = (d_in_p * hid_p + hid_p * d_out_p) * cd_bytes + bias_bytes

    def resident_footprint(tm_):
        # weights counted twice (conservative: pipeline may still double-buffer
        # grid-invariant blocks) + double-buffered x/out tiles + fc1 slab.
        return (2 * weights_bytes
                + 2 * tm_ * d_in_p * x_bytes
                + 2 * tm_ * d_out_p * out_bytes
                + tm_ * hid_p * (4 + cd_bytes)
                + tm_ * d_out_p * 4)

    use_resident = False
    if 2 * weights_bytes <= pol["resident_budget"]:
        for _ in range(4):
            if resident_footprint(tm) <= pol["resident_budget"]:
                use_resident = True
                break
            new_tm = max(8, _round_up(tm // 2, 8))
            if new_tm == tm:
                break
            tm = new_tm

    # ---------------- hidden reduction tile (tiled fallback only) -----------
    def pick_th(cap):
        t = max(128, min(cap, hid_p))
        t = (t // 128) * 128
        while hid_p % t != 0:
            t -= 128
        return t

    th = pick_th(pol["th_cap"])

    def tiled_footprint(tm_, th_):
        return (2 * tm_ * d_in_p * x_bytes
                + 2 * tm_ * d_out_p * out_bytes
                + 2 * (d_in_p * th_ + th_ * d_out_p) * cd_bytes
                + bias_bytes
                + tm_ * d_out_p * 4
                + tm_ * th_ * (4 + cd_bytes))

    if not use_resident:
        budget = int(pol["vmem_cap"] * 0.75)
        for _ in range(8):
            if tiled_footprint(tm, th) <= budget:
                break
            if th > 256:
                th = pick_th(th // 2)
            elif tm > 64:
                tm = max(64, _round_up(tm // 2, 8))
            else:
                break

    # ---------------- megacore: keep the parallel axis split-able -----------
    if pol["want_even_m_tiles"] and m > 8:
        for _ in range(4):
            n_tiles = _round_up(m, tm) // tm
            ok = n_tiles >= 2 and (n_tiles % 2 == 0 or n_tiles >= 8)
            if ok or tm <= 8:
                break
            tm = max(8, _round_up(tm // 2, 8))

    m_p = _round_up(m, tm)
    n_m_tiles = m_p // tm

    # ---------------- activation padding (only when actually needed) --------
    needs_pad = (m_p != m) or (d_in_p != d_in)
    if needs_pad:
        xk = jnp.zeros((m_p, d_in_p), cd).at[:m, :d_in].set(x2d.astype(cd))
        xk_bytes = cd_bytes
    else:
        xk = x2d                    # cast to compute dtype inside the kernel
        xk_bytes = jnp.dtype(x2d.dtype).itemsize

    flops = 2 * m_p * hid_p * (d_in_p + d_out_p)
    transcendentals = m_p * hid_p   # one erf per hidden activation

    if use_resident:
        grid = (n_m_tiles,)
        in_specs = [
            pl.BlockSpec((tm, d_in_p), lambda i: (i, 0)),        # x
            pl.BlockSpec((d_in_p, hid_p), lambda i: (0, 0)),     # w1 (resident)
            pl.BlockSpec((1, hid_p), lambda i: (0, 0)),          # b1 (resident)
            pl.BlockSpec((hid_p, d_out_p), lambda i: (0, 0)),    # w2 (resident)
            pl.BlockSpec((1, d_out_p), lambda i: (0, 0)),        # b2 (resident)
        ]
        out_spec = pl.BlockSpec((tm, d_out_p), lambda i: (i, 0))
        scratch = []
        kernel = functools.partial(_mlp_kernel_resident, precision=precision)
        dims = ("parallel",)
        b1_arg = b1p
        bytes_accessed = (m_p * d_in_p * xk_bytes + weights_bytes
                          + m_p * d_out_p * out_bytes)
        vmem_est = resident_footprint(tm)
    else:
        n_h_tiles = hid_p // th
        b1_arg = b1p.reshape(n_h_tiles, th)     # resident, row-indexed per step
        grid = (n_m_tiles, n_h_tiles)
        in_specs = [
            pl.BlockSpec((tm, d_in_p), lambda i, h: (i, 0)),     # x
            pl.BlockSpec((d_in_p, th), lambda i, h: (0, h)),     # w1 block
            pl.BlockSpec((n_h_tiles, th), lambda i, h: (0, 0)),  # b1 (resident)
            pl.BlockSpec((th, d_out_p), lambda i, h: (h, 0)),    # w2 block
            pl.BlockSpec((1, d_out_p), lambda i, h: (0, 0)),     # b2 (resident)
        ]
        out_spec = pl.BlockSpec((tm, d_out_p), lambda i, h: (i, 0))
        use_out_as_acc = (out_dtype == jnp.dtype(jnp.float32))
        scratch = ([] if use_out_as_acc
                   else [pltpu.VMEM((tm, d_out_p), jnp.float32)])
        kernel = functools.partial(_mlp_kernel_tiled, precision=precision)
        dims = ("parallel", "arbitrary")
        # this path re-streams the full weights once per token tile
        bytes_accessed = (m_p * d_in_p * xk_bytes
                          + n_m_tiles * (d_in_p * hid_p
                                         + hid_p * d_out_p) * cd_bytes
                          + bias_bytes
                          + m_p * d_out_p * out_bytes)
        vmem_est = tiled_footprint(tm, th)

    cost = pl.CostEstimate(flops=int(flops),
                           transcendentals=int(transcendentals),
                           bytes_accessed=int(bytes_accessed))

    vmem_limit = None
    if vmem_est > pol["scoped_default"]:
        vmem_limit = min(int(vmem_est * 1.15) + (1 << 20),
                         pol["vmem_limit_cap"])

    out = pl.pallas_call(
        kernel,
        out_shape=jax.ShapeDtypeStruct((m_p, d_out_p), out_dtype),
        grid_spec=pltpu.PrefetchScalarGridSpec(
            num_scalar_prefetch=0,
            grid=grid,
            in_specs=in_specs,
            out_specs=out_spec,
            scratch_shapes=scratch),
        compiler_params=pltpu.CompilerParams(
            dimension_semantics=dims,
            vmem_limit_bytes=vmem_limit),
        cost_estimate=cost,
    )(xk, w1p, b1_arg, w2p, b2p)

    out = out[:m, :d_out]
    return out.reshape(orig_shape[:-1] + (d_out,))


# ---------------------------------------------------------------------------
# Module-like wrapper: pads / casts the static weights exactly once.
# ---------------------------------------------------------------------------
class PallasMlp:
    """Pallas-TPU forward of the PyTorch `Mlp` module.

    Weights are stored in (in, out) layout (transpose of nn.Linear.weight),
    zero-padded to MXU-friendly multiples and cast to the compute dtype once
    here, so each forward call only streams the activation.
    """

    def __init__(self, w1, b1, w2, b2, *, compute_dtype=jnp.bfloat16):
        feat_mult = _POLICY["feat_mult"]
        self.d_in, self.hidden = w1.shape
        self.d_out = w2.shape[1]
        cd = jnp.dtype(compute_dtype)

        d_in_p = _round_up(self.d_in, feat_mult)
        hid_p = _round_up(self.hidden, feat_mult)
        d_out_p = _round_up(self.d_out, feat_mult)

        # zero-padding is exact: padded inputs/hidden contribute 0, padded
        # output columns are sliced off in the forward.
        self.w1p = jnp.zeros((d_in_p, hid_p), cd).at[
            :self.d_in, :self.hidden].set(w1.astype(cd))
        self.w2p = jnp.zeros((hid_p, d_out_p), cd).at[
            :self.hidden, :self.d_out].set(w2.astype(cd))
        self.b1p = jnp.zeros((1, hid_p), jnp.float32).at[
            0, :self.hidden].set(b1.astype(jnp.float32))
        self.b2p = jnp.zeros((1, d_out_p), jnp.float32).at[
            0, :self.d_out].set(b2.astype(jnp.float32))

    def __call__(self, x):
        return _mlp_forward_padded(x, self.w1p, self.b1p, self.w2p, self.b2p,
                                   d_in=self.d_in, d_out=self.d_out)


# ---------------------------------------------------------------------------
# Parameter init (matches the PyTorch module's _init_weights) and reference.
# ---------------------------------------------------------------------------
def init_mlp_params(key, in_features, hidden_features=None, out_features=None,
                    dtype=jnp.float32):
    hidden_features = hidden_features or in_features
    out_features = out_features or in_features
    k1, k2, k3, k4 = jax.random.split(key, 4)

    def xavier_uniform(k, fan_in, fan_out):
        limit = math.sqrt(6.0 / (fan_in + fan_out))
        # stored directly in (in, out) layout for the kernel
        return jax.random.uniform(k, (fan_in, fan_out), dtype, -limit, limit)

    w1 = xavier_uniform(k1, in_features, hidden_features)
    b1 = (1e-6 * jax.random.normal(k2, (hidden_features,))).astype(dtype)
    w2 = xavier_uniform(k3, hidden_features, out_features)
    b2 = (1e-6 * jax.random.normal(k4, (out_features,))).astype(dtype)
    return w1, b1, w2, b2


def mlp_reference(x, w1, b1, w2, b2):
    hi = jax.lax.Precision.HIGHEST
    h = jnp.dot(x, w1, precision=hi) + b1
    h = _gelu_exact(h)
    return jnp.dot(h, w2, precision=hi) + b2


if __name__ == "__main__":
    key = jax.random.PRNGKey(0)
    kx, kp = jax.random.split(key)

    # small shapes consistent with a transformer MLP: (batch, seq, in_features)
    B, N, D_IN, D_HID = 2, 8, 32, 64
    x = jax.random.normal(kx, (B, N, D_IN), dtype=jnp.float32)
    w1, b1, w2, b2 = init_mlp_params(kp, D_IN, hidden_features=D_HID)

    y_ref = mlp_reference(x, w1, b1, w2, b2)

    # strict-parity path (f32 compute, HIGHEST matmul precision)
    mlp_f32 = PallasMlp(w1, b1, w2, b2, compute_dtype=jnp.float32)
    y_f32 = mlp_f32(x)
    jax.block_until_ready(y_f32)
    assert y_f32.shape == (B, N, D_IN)
    assert jnp.allclose(y_f32, y_ref, atol=1e-5, rtol=1e-5), "f32 mismatch"

    # performance path (bf16 matmul inputs, f32 accumulation)
    mlp_bf16 = PallasMlp(w1, b1, w2, b2, compute_dtype=jnp.bfloat16)
    y_bf16 = mlp_bf16(x)
    jax.block_until_ready(y_bf16)
    assert y_bf16.shape == (B, N, D_IN)
    assert jnp.allclose(y_bf16, y_ref, atol=3e-2, rtol=3e-2), "bf16 mismatch"

    print("KERNEL_OK")
</pallas_src>

<mosaic_0001>
module attributes {stable_mosaic.version = 11 : i64} {
  func.func @_mlp_kernel_resident(%arg0: i32, %arg1: memref<16x128xf32, #tpu.memory_space<vmem>>, %arg2: memref<128x128xf32, #tpu.memory_space<vmem>>, %arg3: memref<1x128xf32, #tpu.memory_space<vmem>>, %arg4: memref<128x128xf32, #tpu.memory_space<vmem>>, %arg5: memref<1x128xf32, #tpu.memory_space<vmem>>, %arg6: memref<16x128xf32, #tpu.memory_space<vmem>>) attributes {dimension_semantics = [#tpu.dimension_semantics<parallel>], iteration_bounds = array<i64: 1>, scalar_prefetch = 0 : i64, scratch_operands = 0 : i64, tpu.core_type = #tpu.core_type<tc>, window_params = [{transform_indices = @transform_0, window_bounds = array<i64: 16, 128>}, {pipeline_mode = #tpu.pipeline_mode<synchronous>, transform_indices = @transform_1, window_bounds = array<i64: 128, 128>}, {pipeline_mode = #tpu.pipeline_mode<synchronous>, transform_indices = @transform_2, window_bounds = array<i64: 1, 128>}, {pipeline_mode = #tpu.pipeline_mode<synchronous>, transform_indices = @transform_3, window_bounds = array<i64: 128, 128>}, {pipeline_mode = #tpu.pipeline_mode<synchronous>, transform_indices = @transform_4, window_bounds = array<i64: 1, 128>}, {transform_indices = @transform_5, window_bounds = array<i64: 16, 128>}]} {
    %c0 = arith.constant 0 : index
    %c0_0 = arith.constant 0 : index
    %0 = vector.load %arg1[%c0, %c0_0] : memref<16x128xf32, #tpu.memory_space<vmem>>, vector<16x128xf32>
    %c0_1 = arith.constant 0 : index
    %c0_2 = arith.constant 0 : index
    %1 = vector.load %arg2[%c0_1, %c0_2] : memref<128x128xf32, #tpu.memory_space<vmem>>, vector<128x128xf32>
    %cst = arith.constant dense<0.000000e+00> : vector<16x128xf32>
    %2 = tpu.matmul %0, %1, %cst {dimension_numbers = #tpu.dot_dimension_numbers<[1], [0], [0], [1], [0, 0, 1, 1], [], []>, precision = #tpu.contract_precision<fp32>} : vector<16x128xf32>, vector<128x128xf32>, vector<16x128xf32> -> vector<16x128xf32>
    %c0_3 = arith.constant 0 : index
    %c0_4 = arith.constant 0 : index
    %3 = vector.load %arg3[%c0_3, %c0_4] : memref<1x128xf32, #tpu.memory_space<vmem>>, vector<1x128xf32>
    %4 = vector.broadcast %3 : vector<1x128xf32> to vector<16x128xf32>
    %5 = arith.addf %2, %4 : vector<16x128xf32>
    %cst_5 = arith.constant 5.000000e-01 : f32
    %6 = vector.broadcast %cst_5 : f32 to vector<16x128xf32>
    %7 = arith.mulf %6, %5 : vector<16x128xf32>
    %cst_6 = arith.constant 0.707106769 : f32
    %8 = vector.broadcast %cst_6 : f32 to vector<16x128xf32>
    %9 = arith.mulf %5, %8 : vector<16x128xf32>
    %10 = math.erf %9 : vector<16x128xf32>
    %cst_7 = arith.constant 1.000000e+00 : f32
    %11 = vector.broadcast %cst_7 : f32 to vector<16x128xf32>
    %12 = arith.addf %11, %10 : vector<16x128xf32>
    %13 = arith.mulf %7, %12 : vector<16x128xf32>
    %c0_8 = arith.constant 0 : index
    %c0_9 = arith.constant 0 : index
    %14 = vector.load %arg4[%c0_8, %c0_9] : memref<128x128xf32, #tpu.memory_space<vmem>>, vector<128x128xf32>
    %cst_10 = arith.constant dense<0.000000e+00> : vector<16x128xf32>
    %15 = tpu.matmul %13, %14, %cst_10 {dimension_numbers = #tpu.dot_dimension_numbers<[1], [0], [0], [1], [0, 0, 1, 1], [], []>, precision = #tpu.contract_precision<fp32>} : vector<16x128xf32>, vector<128x128xf32>, vector<16x128xf32> -> vector<16x128xf32>
    %c0_11 = arith.constant 0 : index
    %c0_12 = arith.constant 0 : index
    %16 = vector.load %arg5[%c0_11, %c0_12] : memref<1x128xf32, #tpu.memory_space<vmem>>, vector<1x128xf32>
    %17 = vector.broadcast %16 : vector<1x128xf32> to vector<16x128xf32>
    %18 = arith.addf %15, %17 : vector<16x128xf32>
    %c0_13 = arith.constant 0 : index
    %c0_14 = arith.constant 0 : index
    %19 = vector.load %arg6[%c0_13, %c0_14] : memref<16x128xf32, #tpu.memory_space<vmem>>, vector<16x128xf32>
    tpu.vector_store %arg6[%c0_13, %c0_14], %18 {strides = array<i32>} : memref<16x128xf32, #tpu.memory_space<vmem>>, vector<16x128xf32>,
    return
  }
  func.func @transform_0(%arg0: i32) -> (i32, i32) {
    %c0_i32 = arith.constant 0 : i32
    %c0_i32_0 = arith.constant 0 : i32
    return %arg0, %c0_i32 : i32, i32
  }
  func.func @transform_1(%arg0: i32) -> (i32, i32) {
    %c0_i32 = arith.constant 0 : i32
    %c0_i32_0 = arith.constant 0 : i32
    %c0_i32_1 = arith.constant 0 : i32
    return %c0_i32, %c0_i32_0 : i32, i32
  }
  func.func @transform_2(%arg0: i32) -> (i32, i32) {
    %c0_i32 = arith.constant 0 : i32
    %c0_i32_0 = arith.constant 0 : i32
    %c0_i32_1 = arith.constant 0 : i32
    return %c0_i32, %c0_i32_0 : i32, i32
  }
  func.func @transform_3(%arg0: i32) -> (i32, i32) {
    %c0_i32 = arith.constant 0 : i32
    %c0_i32_0 = arith.constant 0 : i32
    %c0_i32_1 = arith.constant 0 : i32
    return %c0_i32, %c0_i32_0 : i32, i32
  }
  func.func @transform_4(%arg0: i32) -> (i32, i32) {
    %c0_i32 = arith.constant 0 : i32
    %c0_i32_0 = arith.constant 0 : i32
    %c0_i32_1 = arith.constant 0 : i32
    return %c0_i32, %c0_i32_0 : i32, i32
  }
  func.func @transform_5(%arg0: i32) -> (i32, i32) {
    %c0_i32 = arith.constant 0 : i32
    %c0_i32_0 = arith.constant 0 : i32
    return %arg0, %c0_i32 : i32, i32
  }
}

</mosaic_0001>

<llo_original>
// kernel: _mlp_forward_padded.1
$region0: #{_mlp_forward_padded.1}
  #allocation0 [shape = 'u32[]', space=smem, size = 0x4, offset = 0x4, fixed_abs, tag = 'smem constant byte address 0x4 - core index']
  #allocation1 [shape = 'u32[144,128]{1,0:T(1,128)}', space=vmem, size = 0x12000, scoped, tag = 'internal scratch']
  %s0 = inlined_call_operand.vmem [shape: f32[16,128], index: 0, kind: input, shape index: {}]
  %s1 = inlined_call_operand.hbm [shape: f32[128,128], index: 1, kind: input, shape index: {}]
  %s2 = inlined_call_operand.vmem [shape: f32[1,128], index: 2, kind: input, shape index: {}]
  %s3 = inlined_call_operand.hbm [shape: f32[128,128], index: 3, kind: input, shape index: {}]
  %s4 = inlined_call_operand.vmem [shape: f32[1,128], index: 4, kind: input, shape index: {}]
  %s5 = inlined_call_operand.vmem [shape: f32[16,128], index: 5, kind: output, shape index: {}]
  %s6 = sld [smem:[#allocation0]]
  $region38: #{_mlp_forward_padded.1} parent=0
    _
  %s8 = ssub.s32 1, %s6
  %s9 = scalar_select 0, %s8, %s6
  $region1: #{_mlp_forward_padded.1} parent=0
    #allocation2 [shape = 'u8[65536]{0}', space=vmem, size = 0x10000, scoped, tag = 'input window, operand 1, single buffered']
    #allocation3 [shape = 's32[1]{0}', space=sflag, size = 0x4, scoped, tag = 'scoped memory for _mlp_forward_padded.1']
    #allocation4 [shape = 'u8[65536]{0}', space=vmem, size = 0x10000, scoped, tag = 'input window, operand 3, single buffered']
    #allocation5 [shape = 's32[1]{0}', space=sflag, size = 0x4, scoped, tag = 'scoped memory for _mlp_forward_padded.1']
    %10 = vsyncpa [#allocation3], 0
    %11 = vsyncpa [#allocation5], 0
    // Predicated region
    $region2: #{_mlp_forward_padded.1} parent=1 // pred_check
      _
    $region3: #{_mlp_forward_padded.1} parent=1 // pred_check_branch
      %13 = sbr.rel (0) target = $region5
    $region4: #{_mlp_forward_padded.1} parent=1 // pred_region
      _
    $region5: #{_mlp_forward_padded.1} parent=1 // pred_fallthru
      _
    // Predicated region
    $region6: #{_mlp_forward_padded.1} parent=1 // pred_check
      _
    $region7: #{_mlp_forward_padded.1} parent=1 // pred_check_branch
      %15 = sbr.rel (0) target = $region9
    $region8: #{_mlp_forward_padded.1} parent=1 // pred_region
      %s17 = ssub.s32 2048, 2048
      %18 = vsyncadd [#allocation3], %s17
      %s19 = sshll.u32 [#allocation2], 4
      %s20 = int_to_ptr.vmem [resolvable:$true] %s19
      %25 = dma.hbm_to_vmem [thread:$0]  %s1, 2048, %s20, [#allocation3], 128, 128, 8
    $region9: #{_mlp_forward_padded.1} parent=1 // pred_fallthru
      _
    // Predicated region
    $region10: #{_mlp_forward_padded.1} parent=1 // pred_check
      _
    $region11: #{_mlp_forward_padded.1} parent=1 // pred_check_branch
      %27 = sbr.rel (0) target = $region13
    $region12: #{_mlp_forward_padded.1} parent=1 // pred_region
      _
    $region13: #{_mlp_forward_padded.1} parent=1 // pred_fallthru
      _
    // Predicated region
    $region14: #{_mlp_forward_padded.1} parent=1 // pred_check
      _
    $region15: #{_mlp_forward_padded.1} parent=1 // pred_check_branch
      %29 = sbr.rel (0) target = $region17
    $region16: #{_mlp_forward_padded.1} parent=1 // pred_region
      %s31 = ssub.s32 2048, 2048
      %32 = vsyncadd [#allocation5], %s31
      %s33 = sshll.u32 [#allocation4], 4
      %s34 = int_to_ptr.vmem [resolvable:$true] %s33
      %39 = dma.hbm_to_vmem [thread:$0]  %s3, 2048, %s34, [#allocation5], 128, 128, 8
    $region17: #{_mlp_forward_padded.1} parent=1 // pred_fallthru
      _
    // Predicated region
    $region18: #{_mlp_forward_padded.1} parent=1 // pred_check
      _
    $region19: #{_mlp_forward_padded.1} parent=1 // pred_check_branch
      %41 = sbr.rel (0) target = $region21
    $region20: #{_mlp_forward_padded.1} parent=1 // pred_region
      _
    $region21: #{_mlp_forward_padded.1} parent=1 // pred_fallthru
      _
    // Predicated region
    $region22: #{_mlp_forward_padded.1} parent=1 // pred_check
      _
    $region23: #{_mlp_forward_padded.1} parent=1 // pred_check_branch
      %43 = sbr.rel (0) target = $region25
    $region24: #{_mlp_forward_padded.1} parent=1 // pred_region
      %44 = dma.done [#allocation3], 2048
    $region25: #{_mlp_forward_padded.1} parent=1 // pred_fallthru
      _
    // Predicated region
    $region26: #{_mlp_forward_padded.1} parent=1 // pred_check
      _
    $region27: #{_mlp_forward_padded.1} parent=1 // pred_check_branch
      %46 = sbr.rel (0) target = $region29
    $region28: #{_mlp_forward_padded.1} parent=1 // pred_region
      %47 = dma.done [#allocation5], 2048
    $region29: #{_mlp_forward_padded.1} parent=1 // pred_fallthru
      _
    %v48 = vld [vmem:[%s0] sm:$0xff]
    %v49 = vld [vmem:[%s0 + $0x8] sm:$0xff]
    %v50 = vld [vmem:[#allocation2] sm:$0xff]
    %v51 = vld [vmem:[#allocation2 + $0x8] sm:$0xff]
    %v52 = vld [vmem:[#allocation2 + $0x10] sm:$0xff]
    %v53 = vld [vmem:[#allocation2 + $0x18] sm:$0xff]
    %v54 = vld [vmem:[#allocation2 + $0x20] sm:$0xff]
    %v55 = vld [vmem:[#allocation2 + $0x28] sm:$0xff]
    %v56 = vld [vmem:[#allocation2 + $0x30] sm:$0xff]
    %v57 = vld [vmem:[#allocation2 + $0x38] sm:$0xff]
    %v58 = vld [vmem:[#allocation2 + $0x40] sm:$0xff]
    %v59 = vld [vmem:[#allocation2 + $0x48] sm:$0xff]
    %v60 = vld [vmem:[#allocation2 + $0x50] sm:$0xff]
    %v61 = vld [vmem:[#allocation2 + $0x58] sm:$0xff]
    %v62 = vld [vmem:[#allocation2 + $0x60] sm:$0xff]
    %v63 = vld [vmem:[#allocation2 + $0x68] sm:$0xff]
    %v64 = vld [vmem:[#allocation2 + $0x70] sm:$0xff]
    %v65 = vld [vmem:[#allocation2 + $0x78] sm:$0xff]
    %v66 = vld [vmem:[%s2] sm:$0x1]
    %v68 = vlaneseq
    %v69 = vshrl.u32 %v68, 7
    %v70 = vsub.s32 0, %v69
    %v71 = vrot.slane %v66, %v70
    %73 = vmatprep.subr.mxu0 0.0
    %v74 = vand.u32 %v50, 4294901760
    %75 = vmatpush1.msra.mxu0 %v74
    %76 = vmatprep.subr.mxu0 0.0
    %v77 = vand.u32 %v51, 4294901760
    %78 = vmatpush1.msra.mxu0 %v77
    %79 = vmatprep.subr.mxu0 0.0
    %v80 = vand.u32 %v52, 4294901760
    %81 = vmatpush1.msra.mxu0 %v80
    %82 = vmatprep.subr.mxu0 0.0
    %v83 = vand.u32 %v53, 4294901760
    %84 = vmatpush1.msra.mxu0 %v83
    %85 = vmatprep.subr.mxu0 0.0
    %v86 = vand.u32 %v54, 4294901760
    %87 = vmatpush1.msra.mxu0 %v86
    %88 = vmatprep.subr.mxu0 0.0
    %v89 = vand.u32 %v55, 4294901760
    %90 = vmatpush1.msra.mxu0 %v89
    %91 = vmatprep.subr.mxu0 0.0
    %v92 = vand.u32 %v56, 4294901760
    %93 = vmatpush1.msra.mxu0 %v92
    %94 = vmatprep.subr.mxu0 0.0
    %v95 = vand.u32 %v57, 4294901760
    %96 = vmatpush1.msra.mxu0 %v95
    %97 = vmatprep.subr.mxu0 0.0
    %v98 = vand.u32 %v58, 4294901760
    %99 = vmatpush1.msra.mxu0 %v98
    %100 = vmatprep.subr.mxu0 0.0
    %v101 = vand.u32 %v59, 4294901760
    %102 = vmatpush1.msra.mxu0 %v101
    %103 = vmatprep.subr.mxu0 0.0
    %v104 = vand.u32 %v60, 4294901760
    %105 = vmatpush1.msra.mxu0 %v104
    %106 = vmatprep.subr.mxu0 0.0
    %v107 = vand.u32 %v61, 4294901760
    %108 = vmatpush1.msra.mxu0 %v107
    %109 = vmatprep.subr.mxu0 0.0
    %v110 = vand.u32 %v62, 4294901760
    %111 = vmatpush1.msra.mxu0 %v110
    %112 = vmatprep.subr.mxu0 0.0
    %v113 = vand.u32 %v63, 4294901760
    %114 = vmatpush1.msra.mxu0 %v113
    %115 = vmatprep.subr.mxu0 0.0
    %v116 = vand.u32 %v64, 4294901760
    %117 = vmatpush1.msra.mxu0 %v116
    %118 = vmatprep.subr.mxu0 0.0
    %v119 = vand.u32 %v65, 4294901760
    %120 = vmatpush1.msra.mxu0 %v119
    %121 = vmatprep.subr.mxu0 0.0
    %122 = vmatpush1.msra.mxu0 0.0
    %123 = vmatprep.subr.mxu0 0.0
    %124 = vmatpush1.msra.mxu0 0.0
    %125 = vmatprep.subr.mxu0 0.0
    %126 = vmatpush1.msra.mxu0 0.0
    %127 = vmatprep.subr.mxu0 0.0
    %128 = vmatpush1.msra.mxu0 0.0
    %129 = vmatprep.subr.mxu0 0.0
    %130 = vmatpush1.msra.mxu0 0.0
    %131 = vmatprep.subr.mxu0 0.0
    %132 = vmatpush1.msra.mxu0 0.0
    %133 = vmatprep.subr.mxu0 0.0
    %134 = vmatpush1.msra.mxu0 0.0
    %135 = vmatprep.subr.mxu0 0.0
    %136 = vmatpush1.msra.mxu0 0.0
    %137 = vmatprep.subr.mxu0 0.0
    %138 = vmatpush1.msra.mxu0 0.0
    %139 = vmatprep.subr.mxu0 0.0
    %140 = vmatpush1.msra.mxu0 0.0
    %141 = vmatprep.subr.mxu0 0.0
    %142 = vmatpush1.msra.mxu0 0.0
    %143 = vmatprep.subr.mxu0 0.0
    %144 = vmatpush1.msra.mxu0 0.0
    %145 = vmatprep.subr.mxu0 0.0
    %146 = vmatpush1.msra.mxu0 0.0
    %147 = vmatprep.subr.mxu0 0.0
    %148 = vmatpush1.msra.mxu0 0.0
    %149 = vmatprep.subr.mxu0 0.0
    %150 = vmatpush1.msra.mxu0 0.0
    %151 = vmatprep.subr.mxu0 0.0
    %152 = vmatpush1.msra.mxu0 0.0
    %153 = vmatprep.mubr.f32.mxu0 0.0
    %v154 = vand.u32 %v48, 4294901760
    %v155 = vsub.f32 %v48, %v154
    %v156 = vand.u32 %v155, 4294901760
    %v157 = vsub.f32 %v155, %v156
    %v158 = vand.u32 %v157, 4294901760
    %159 = vmatmul.mubr.f32.gmra.mrb[0].mxu0 %v158
    %v160 = vpop.f32.mrb[0].mxu0
    %v161 = vadd.f32 %v71, %v160
    %v162 = vpop.f32.mrb[0].mxu0
    %163 = vmatprep.mubr.f32.mxu0 0.0
    %v164 = vand.u32 %v49, 4294901760
    %v165 = vsub.f32 %v49, %v164
    %v166 = vand.u32 %v165, 4294901760
    %v167 = vsub.f32 %v165, %v166
    %v168 = vand.u32 %v167, 4294901760
    %169 = vmatmul.mubr.f32.gmra.mrb[0].mxu0 %v168
    %v170 = vpop.f32.mrb[0].mxu0
    %v171 = vadd.f32 %v71, %v170
    %v172 = vpop.f32.mrb[0].mxu0
    %173 = vdwg.mxu0
    %174 = vmatprep.subr.mxu0 0.0
    %v175 = vand.u32 %v50, 4294901760
    %v176 = vsub.f32 %v50, %v175
    %v177 = vand.u32 %v176, 4294901760
    %v178 = vsub.f32 %v176, %v177
    %v179 = vand.u32 %v178, 4294901760
    %180 = vmatpush1.msra.mxu0 %v179
    %181 = vmatprep.subr.mxu0 0.0
    %v182 = vand.u32 %v51, 4294901760
    %v183 = vsub.f32 %v51, %v182
    %v184 = vand.u32 %v183, 4294901760
    %v185 = vsub.f32 %v183, %v184
    %v186 = vand.u32 %v185, 4294901760
    %187 = vmatpush1.msra.mxu0 %v186
    %188 = vmatprep.subr.mxu0 0.0
    %v189 = vand.u32 %v52, 4294901760
    %v190 = vsub.f32 %v52, %v189
    %v191 = vand.u32 %v190, 4294901760
    %v192 = vsub.f32 %v190, %v191
    %v193 = vand.u32 %v192, 4294901760
    %194 = vmatpush1.msra.mxu0 %v193
    %195 = vmatprep.subr.mxu0 0.0
    %v196 = vand.u32 %v53, 4294901760
    %v197 = vsub.f32 %v53, %v196
    %v198 = vand.u32 %v197, 4294901760
    %v199 = vsub.f32 %v197, %v198
    %v200 = vand.u32 %v199, 4294901760
    %201 = vmatpush1.msra.mxu0 %v200
    %202 = vmatprep.subr.mxu0 0.0
    %v203 = vand.u32 %v54, 4294901760
    %v204 = vsub.f32 %v54, %v203
    %v205 = vand.u32 %v204, 4294901760
    %v206 = vsub.f32 %v204, %v205
    %v207 = vand.u32 %v206, 4294901760
    %208 = vmatpush1.msra.mxu0 %v207
    %209 = vmatprep.subr.mxu0 0.0
    %v210 = vand.u32 %v55, 4294901760
    %v211 = vsub.f32 %v55, %v210
    %v212 = vand.u32 %v211, 4294901760
    %v213 = vsub.f32 %v211, %v212
    %v214 = vand.u32 %v213, 4294901760
    %215 = vmatpush1.msra.mxu0 %v214
    %216 = vmatprep.subr.mxu0 0.0
    %v217 = vand.u32 %v56, 4294901760
    %v218 = vsub.f32 %v56, %v217
    %v219 = vand.u32 %v218, 4294901760
    %v220 = vsub.f32 %v218, %v219
    %v221 = vand.u32 %v220, 4294901760
    %222 = vmatpush1.msra.mxu0 %v221
    %223 = vmatprep.subr.mxu0 0.0
    %v224 = vand.u32 %v57, 4294901760
    %v225 = vsub.f32 %v57, %v224
    %v226 = vand.u32 %v225, 4294901760
    %v227 = vsub.f32 %v225, %v226
    %v228 = vand.u32 %v227, 4294901760
    %229 = vmatpush1.msra.mxu0 %v228
    %230 = vmatprep.subr.mxu0 0.0
    %v231 = vand.u32 %v58, 4294901760
    %v232 = vsub.f32 %v58, %v231
    %v233 = vand.u32 %v232, 4294901760
    %v234 = vsub.f32 %v232, %v233
    %v235 = vand.u32 %v234, 4294901760
    %236 = vmatpush1.msra.mxu0 %v235
    %237 = vmatprep.subr.mxu0 0.0
    %v238 = vand.u32 %v59, 4294901760
    %v239 = vsub.f32 %v59, %v238
    %v240 = vand.u32 %v239, 4294901760
    %v241 = vsub.f32 %v239, %v240
    %v242 = vand.u32 %v241, 4294901760
    %243 = vmatpush1.msra.mxu0 %v242
    %244 = vmatprep.subr.mxu0 0.0
    %v245 = vand.u32 %v60, 4294901760
    %v246 = vsub.f32 %v60, %v245
    %v247 = vand.u32 %v246, 4294901760
    %v248 = vsub.f32 %v246, %v247
    %v249 = vand.u32 %v248, 4294901760
    %250 = vmatpush1.msra.mxu0 %v249
    %251 = vmatprep.subr.mxu0 0.0
    %v252 = vand.u32 %v61, 4294901760
    %v253 = vsub.f32 %v61, %v252
    %v254 = vand.u32 %v253, 4294901760
    %v255 = vsub.f32 %v253, %v254
    %v256 = vand.u32 %v255, 4294901760
    %257 = vmatpush1.msra.mxu0 %v256
    %258 = vmatprep.subr.mxu0 0.0
    %v259 = vand.u32 %v62, 4294901760
    %v260 = vsub.f32 %v62, %v259
    %v261 = vand.u32 %v260, 4294901760
    %v262 = vsub.f32 %v260, %v261
    %v263 = vand.u32 %v262, 4294901760
    %264 = vmatpush1.msra.mxu0 %v263
    %265 = vmatprep.subr.mxu0 0.0
    %v266 = vand.u32 %v63, 4294901760
    %v267 = vsub.f32 %v63, %v266
    %v268 = vand.u32 %v267, 4294901760
    %v269 = vsub.f32 %v267, %v268
    %v270 = vand.u32 %v269, 4294901760
    %271 = vmatpush1.msra.mxu0 %v270
    %272 = vmatprep.subr.mxu0 0.0
    %v273 = vand.u32 %v64, 4294901760
    %v274 = vsub.f32 %v64, %v273
    %v275 = vand.u32 %v274, 4294901760
    %v276 = vsub.f32 %v274, %v275
    %v277 = vand.u32 %v276, 4294901760
    %278 = vmatpush1.msra.mxu0 %v277
    %279 = vmatprep.subr.mxu0 0.0
    %v280 = vand.u32 %v65, 4294901760
    %v281 = vsub.f32 %v65, %v280
    %v282 = vand.u32 %v281, 4294901760
    %v283 = vsub.f32 %v281, %v282
    %v284 = vand.u32 %v283, 4294901760
    %285 = vmatpush1.msra.mxu0 %v284
    %286 = vmatprep.subr.mxu0 0.0
    %287 = vmatpush1.msra.mxu0 0.0
    %288 = vmatprep.subr.mxu0 0.0
    %289 = vmatpush1.msra.mxu0 0.0
    %290 = vmatprep.subr.mxu0 0.0
    %291 = vmatpush1.msra.mxu0 0.0
    %292 = vmatprep.subr.mxu0 0.0
    %293 = vmatpush1.msra.mxu0 0.0
    %294 = vmatprep.subr.mxu0 0.0
    %295 = vmatpush1.msra.mxu0 0.0
    %296 = vmatprep.subr.mxu0 0.0
    %297 = vmatpush1.msra.mxu0 0.0
    %298 = vmatprep.subr.mxu0 0.0
    %299 = vmatpush1.msra.mxu0 0.0
    %300 = vmatprep.subr.mxu0 0.0
    %301 = vmatpush1.msra.mxu0 0.0
    %302 = vmatprep.subr.mxu0 0.0
    %303 = vmatpush1.msra.mxu0 0.0
    %304 = vmatprep.subr.mxu0 0.0
    %305 = vmatpush1.msra.mxu0 0.0
    %306 = vmatprep.subr.mxu0 0.0
    %307 = vmatpush1.msra.mxu0 0.0
    %308 = vmatprep.subr.mxu0 0.0
    %309 = vmatpush1.msra.mxu0 0.0
    %310 = vmatprep.subr.mxu0 0.0
    %311 = vmatpush1.msra.mxu0 0.0
    %312 = vmatprep.subr.mxu0 0.0
    %313 = vmatpush1.msra.mxu0 0.0
    %314 = vmatprep.subr.mxu0 0.0
    %315 = vmatpush1.msra.mxu0 0.0
    %316 = vmatprep.subr.mxu0 0.0
    %317 = vmatpush1.msra.mxu0 0.0
    %318 = vmatprep.mubr.f32.mxu0 0.0
    %v319 = vand.u32 %v48, 4294901760
    %320 = vmatmul.mubr.f32.gmra.mrb[0].mxu0 %v319
    %v321 = vpop.f32.mrb[0].mxu0
    %v322 = vadd.f32 %v161, %v321
    %v323 = vpop.f32.mrb[0].mxu0
    %324 = vmatprep.mubr.f32.mxu0 0.0
    %v325 = vand.u32 %v49, 4294901760
    %326 = vmatmul.mubr.f32.gmra.mrb[0].mxu0 %v325
    %v327 = vpop.f32.mrb[0].mxu0
    %v328 = vadd.f32 %v171, %v327
    %v329 = vpop.f32.mrb[0].mxu0
    %330 = vdwg.mxu0
    %331 = vmatprep.subr.mxu0 0.0
    %v332 = vand.u32 %v50, 4294901760
    %v333 = vsub.f32 %v50, %v332
    %334 = vmatpush1.msra.mxu0 %v333
    %335 = vmatprep.subr.mxu0 0.0
    %v336 = vand.u32 %v51, 4294901760
    %v337 = vsub.f32 %v51, %v336
    %338 = vmatpush1.msra.mxu0 %v337
    %339 = vmatprep.subr.mxu0 0.0
    %v340 = vand.u32 %v52, 4294901760
    %v341 = vsub.f32 %v52, %v340
    %342 = vmatpush1.msra.mxu0 %v341
    %343 = vmatprep.subr.mxu0 0.0
    %v344 = vand.u32 %v53, 4294901760
    %v345 = vsub.f32 %v53, %v344
    %346 = vmatpush1.msra.mxu0 %v345
    %347 = vmatprep.subr.mxu0 0.0
    %v348 = vand.u32 %v54, 4294901760
    %v349 = vsub.f32 %v54, %v348
    %350 = vmatpush1.msra.mxu0 %v349
    %351 = vmatprep.subr.mxu0 0.0
    %v352 = vand.u32 %v55, 4294901760
    %v353 = vsub.f32 %v55, %v352
    %354 = vmatpush1.msra.mxu0 %v353
    %355 = vmatprep.subr.mxu0 0.0
    %v356 = vand.u32 %v56, 4294901760
    %v357 = vsub.f32 %v56, %v356
    %358 = vmatpush1.msra.mxu0 %v357
    %359 = vmatprep.subr.mxu0 0.0
    %v360 = vand.u32 %v57, 4294901760
    %v361 = vsub.f32 %v57, %v360
    %362 = vmatpush1.msra.mxu0 %v361
    %363 = vmatprep.subr.mxu0 0.0
    %v364 = vand.u32 %v58, 4294901760
    %v365 = vsub.f32 %v58, %v364
    %366 = vmatpush1.msra.mxu0 %v365
    %367 = vmatprep.subr.mxu0 0.0
    %v368 = vand.u32 %v59, 4294901760
    %v369 = vsub.f32 %v59, %v368
    %370 = vmatpush1.msra.mxu0 %v369
    %371 = vmatprep.subr.mxu0 0.0
    %v372 = vand.u32 %v60, 4294901760
    %v373 = vsub.f32 %v60, %v372
    %374 = vmatpush1.msra.mxu0 %v373
    %375 = vmatprep.subr.mxu0 0.0
    %v376 = vand.u32 %v61, 4294901760
    %v377 = vsub.f32 %v61, %v376
    %378 = vmatpush1.msra.mxu0 %v377
    %379 = vmatprep.subr.mxu0 0.0
    %v380 = vand.u32 %v62, 4294901760
    %v381 = vsub.f32 %v62, %v380
    %382 = vmatpush1.msra.mxu0 %v381
    %383 = vmatprep.subr.mxu0 0.0
    %v384 = vand.u32 %v63, 4294901760
    %v385 = vsub.f32 %v63, %v384
    %386 = vmatpush1.msra.mxu0 %v385
    %387 = vmatprep.subr.mxu0 0.0
    %v388 = vand.u32 %v64, 4294901760
    %v389 = vsub.f32 %v64, %v388
    %390 = vmatpush1.msra.mxu0 %v389
    %391 = vmatprep.subr.mxu0 0.0
    %v392 = vand.u32 %v65, 4294901760
    %v393 = vsub.f32 %v65, %v392
    %394 = vmatpush1.msra.mxu0 %v393
    %395 = vmatprep.subr.mxu0 0.0
    %396 = vmatpush1.msra.mxu0 0.0
    %397 = vmatprep.subr.mxu0 0.0
    %398 = vmatpush1.msra.mxu0 0.0
    %399 = vmatprep.subr.mxu0 0.0
    %400 = vmatpush1.msra.mxu0 0.0
    %401 = vmatprep.subr.mxu0 0.0
    %402 = vmatpush1.msra.mxu0 0.0
    %403 = vmatprep.subr.mxu0 0.0
    %404 = vmatpush1.msra.mxu0 0.0
    %405 = vmatprep.subr.mxu0 0.0
    %406 = vmatpush1.msra.mxu0 0.0
    %407 = vmatprep.subr.mxu0 0.0
    %408 = vmatpush1.msra.mxu0 0.0
    %409 = vmatprep.subr.mxu0 0.0
    %410 = vmatpush1.msra.mxu0 0.0
    %411 = vmatprep.subr.mxu0 0.0
    %412 = vmatpush1.msra.mxu0 0.0
    %413 = vmatprep.subr.mxu0 0.0
    %414 = vmatpush1.msra.mxu0 0.0
    %415 = vmatprep.subr.mxu0 0.0
    %416 = vmatpush1.msra.mxu0 0.0
    %417 = vmatprep.subr.mxu0 0.0
    %418 = vmatpush1.msra.mxu0 0.0
    %419 = vmatprep.subr.mxu0 0.0
    %420 = vmatpush1.msra.mxu0 0.0
    %421 = vmatprep.subr.mxu0 0.0
    %422 = vmatpush1.msra.mxu0 0.0
    %423 = vmatprep.subr.mxu0 0.0
    %424 = vmatpush1.msra.mxu0 0.0
    %425 = vmatprep.subr.mxu0 0.0
    %426 = vmatpush1.msra.mxu0 0.0
    %427 = vmatprep.mubr.f32.mxu0 0.0
    %v428 = vand.u32 %v48, 4294901760
    %v429 = vsub.f32 %v48, %v428
    %430 = vmatmul.mubr.f32.gmra.mrb[0].mxu0 %v429
    %v431 = vpop.f32.mrb[0].mxu0
    %v432 = vadd.f32 %v322, %v431
    %v433 = vpop.f32.mrb[0].mxu0
    %434 = vmatprep.mubr.f32.mxu0 0.0
    %v435 = vand.u32 %v49, 4294901760
    %v436 = vsub.f32 %v49, %v435
    %437 = vmatmul.mubr.f32.gmra.mrb[0].mxu0 %v436
    %v438 = vpop.f32.mrb[0].mxu0
    %v439 = vadd.f32 %v328, %v438
    %v440 = vpop.f32.mrb[0].mxu0
    %441 = vdwg.mxu0
    %442 = vmatprep.subr.mxu0 0.0
    %v443 = vand.u32 %v50, 4294901760
    %444 = vmatpush1.msra.mxu0 %v443
    %445 = vmatprep.subr.mxu0 0.0
    %v446 = vand.u32 %v51, 4294901760
    %447 = vmatpush1.msra.mxu0 %v446
    %448 = vmatprep.subr.mxu0 0.0
    %v449 = vand.u32 %v52, 4294901760
    %450 = vmatpush1.msra.mxu0 %v449
    %451 = vmatprep.subr.mxu0 0.0
    %v452 = vand.u32 %v53, 4294901760
    %453 = vmatpush1.msra.mxu0 %v452
    %454 = vmatprep.subr.mxu0 0.0
    %v455 = vand.u32 %v54, 4294901760
    %456 = vmatpush1.msra.mxu0 %v455
    %457 = vmatprep.subr.mxu0 0.0
    %v458 = vand.u32 %v55, 4294901760
    %459 = vmatpush1.msra.mxu0 %v458
    %460 = vmatprep.subr.mxu0 0.0
    %v461 = vand.u32 %v56, 4294901760
    %462 = vmatpush1.msra.mxu0 %v461
    %463 = vmatprep.subr.mxu0 0.0
    %v464 = vand.u32 %v57, 4294901760
    %465 = vmatpush1.msra.mxu0 %v464
    %466 = vmatprep.subr.mxu0 0.0
    %v467 = vand.u32 %v58, 4294901760
    %468 = vmatpush1.msra.mxu0 %v467
    %469 = vmatprep.subr.mxu0 0.0
    %v470 = vand.u32 %v59, 4294901760
    %471 = vmatpush1.msra.mxu0 %v470
    %472 = vmatprep.subr.mxu0 0.0
    %v473 = vand.u32 %v60, 4294901760
    %474 = vmatpush1.msra.mxu0 %v473
    %475 = vmatprep.subr.mxu0 0.0
    %v476 = vand.u32 %v61, 4294901760
    %477 = vmatpush1.msra.mxu0 %v476
    %478 = vmatprep.subr.mxu0 0.0
    %v479 = vand.u32 %v62, 4294901760
    %480 = vmatpush1.msra.mxu0 %v479
    %481 = vmatprep.subr.mxu0 0.0
    %v482 = vand.u32 %v63, 4294901760
    %483 = vmatpush1.msra.mxu0 %v482
    %484 = vmatprep.subr.mxu0 0.0
    %v485 = vand.u32 %v64, 4294901760
    %486 = vmatpush1.msra.mxu0 %v485
    %487 = vmatprep.subr.mxu0 0.0
    %v488 = vand.u32 %v65, 4294901760
    %489 = vmatpush1.msra.mxu0 %v488
    %490 = vmatprep.subr.mxu0 0.0
    %491 = vmatpush1.msra.mxu0 0.0
    %492 = vmatprep.subr.mxu0 0.0
    %493 = vmatpush1.msra.mxu0 0.0
    %494 = vmatprep.subr.mxu0 0.0
    %495 = vmatpush1.msra.mxu0 0.0
    %496 = vmatprep.subr.mxu0 0.0
    %497 = vmatpush1.msra.mxu0 0.0
    %498 = vmatprep.subr.mxu0 0.0
    %499 = vmatpush1.msra.mxu0 0.0
    %500 = vmatprep.subr.mxu0 0.0
    %501 = vmatpush1.msra.mxu0 0.0
    %502 = vmatprep.subr.mxu0 0.0
    %503 = vmatpush1.msra.mxu0 0.0
    %504 = vmatprep.subr.mxu0 0.0
    %505 = vmatpush1.msra.mxu0 0.0
    %506 = vmatprep.subr.mxu0 0.0
    %507 = vmatpush1.msra.mxu0 0.0
    %508 = vmatprep.subr.mxu0 0.0
    %509 = vmatpush1.msra.mxu0 0.0
    %510 = vmatprep.subr.mxu0 0.0
    %511 = vmatpush1.msra.mxu0 0.0
    %512 = vmatprep.subr.mxu0 0.0
    %513 = vmatpush1.msra.mxu0 0.0
    %514 = vmatprep.subr.mxu0 0.0
    %515 = vmatpush1.msra.mxu0 0.0
    %516 = vmatprep.subr.mxu0 0.0
    %517 = vmatpush1.msra.mxu0 0.0
    %518 = vmatprep.subr.mxu0 0.0
    %519 = vmatpush1.msra.mxu0 0.0
    %520 = vmatprep.subr.mxu0 0.0
    %521 = vmatpush1.msra.mxu0 0.0
    %522 = vmatprep.mubr.f32.mxu0 0.0
    %v523 = vand.u32 %v48, 4294901760
    %v524 = vsub.f32 %v48, %v523
    %v525 = vand.u32 %v524, 4294901760
    %526 = vmatmul.mubr.f32.gmra.mrb[0].mxu0 %v525
    %v527 = vpop.f32.mrb[0].mxu0
    %v528 = vadd.f32 %v432, %v527
    %v529 = vpop.f32.mrb[0].mxu0
    %530 = vmatprep.mubr.f32.mxu0 0.0
    %v531 = vand.u32 %v49, 4294901760
    %v532 = vsub.f32 %v49, %v531
    %v533 = vand.u32 %v532, 4294901760
    %534 = vmatmul.mubr.f32.gmra.mrb[0].mxu0 %v533
    %v535 = vpop.f32.mrb[0].mxu0
    %v536 = vadd.f32 %v439, %v535
    %v537 = vpop.f32.mrb[0].mxu0
    %538 = vdwg.mxu0
    %539 = vmatprep.subr.mxu0 0.0
    %v540 = vand.u32 %v50, 4294901760
    %v541 = vsub.f32 %v50, %v540
    %v542 = vand.u32 %v541, 4294901760
    %543 = vmatpush1.msra.mxu0 %v542
    %544 = vmatprep.subr.mxu0 0.0
    %v545 = vand.u32 %v51, 4294901760
    %v546 = vsub.f32 %v51, %v545
    %v547 = vand.u32 %v546, 4294901760
    %548 = vmatpush1.msra.mxu0 %v547
    %549 = vmatprep.subr.mxu0 0.0
    %v550 = vand.u32 %v52, 4294901760
    %v551 = vsub.f32 %v52, %v550
    %v552 = vand.u32 %v551, 4294901760
    %553 = vmatpush1.msra.mxu0 %v552
    %554 = vmatprep.subr.mxu0 0.0
    %v555 = vand.u32 %v53, 4294901760
    %v556 = vsub.f32 %v53, %v555
    %v557 = vand.u32 %v556, 4294901760
    %558 = vmatpush1.msra.mxu0 %v557
    %559 = vmatprep.subr.mxu0 0.0
    %v560 = vand.u32 %v54, 4294901760
    %v561 = vsub.f32 %v54, %v560
    %v562 = vand.u32 %v561, 4294901760
    %563 = vmatpush1.msra.mxu0 %v562
    %564 = vmatprep.subr.mxu0 0.0
    %v565 = vand.u32 %v55, 4294901760
    %v566 = vsub.f32 %v55, %v565
    %v567 = vand.u32 %v566, 4294901760
    %568 = vmatpush1.msra.mxu0 %v567
    %569 = vmatprep.subr.mxu0 0.0
    %v570 = vand.u32 %v56, 4294901760
    %v571 = vsub.f32 %v56, %v570
    %v572 = vand.u32 %v571, 4294901760
    %573 = vmatpush1.msra.mxu0 %v572
    %574 = vmatprep.subr.mxu0 0.0
    %v575 = vand.u32 %v57, 4294901760
    %v576 = vsub.f32 %v57, %v575
    %v577 = vand.u32 %v576, 4294901760
    %578 = vmatpush1.msra.mxu0 %v577
    %579 = vmatprep.subr.mxu0 0.0
    %v580 = vand.u32 %v58, 4294901760
    %v581 = vsub.f32 %v58, %v580
    %v582 = vand.u32 %v581, 4294901760
    %583 = vmatpush1.msra.mxu0 %v582
    %584 = vmatprep.subr.mxu0 0.0
    %v585 = vand.u32 %v59, 4294901760
    %v586 = vsub.f32 %v59, %v585
    %v587 = vand.u32 %v586, 4294901760
    %588 = vmatpush1.msra.mxu0 %v587
    %589 = vmatprep.subr.mxu0 0.0
    %v590 = vand.u32 %v60, 4294901760
    %v591 = vsub.f32 %v60, %v590
    %v592 = vand.u32 %v591, 4294901760
    %593 = vmatpush1.msra.mxu0 %v592
    %594 = vmatprep.subr.mxu0 0.0
    %v595 = vand.u32 %v61, 4294901760
    %v596 = vsub.f32 %v61, %v595
    %v597 = vand.u32 %v596, 4294901760
    %598 = vmatpush1.msra.mxu0 %v597
    %599 = vmatprep.subr.mxu0 0.0
    %v600 = vand.u32 %v62, 4294901760
    %v601 = vsub.f32 %v62, %v600
    %v602 = vand.u32 %v601, 4294901760
    %603 = vmatpush1.msra.mxu0 %v602
    %604 = vmatprep.subr.mxu0 0.0
    %v605 = vand.u32 %v63, 4294901760
    %v606 = vsub.f32 %v63, %v605
    %v607 = vand.u32 %v606, 4294901760
    %608 = vmatpush1.msra.mxu0 %v607
    %609 = vmatprep.subr.mxu0 0.0
    %v610 = vand.u32 %v64, 4294901760
    %v611 = vsub.f32 %v64, %v610
    %v612 = vand.u32 %v611, 4294901760
    %613 = vmatpush1.msra.mxu0 %v612
    %614 = vmatprep.subr.mxu0 0.0
    %v615 = vand.u32 %v65, 4294901760
    %v616 = vsub.f32 %v65, %v615
    %v617 = vand.u32 %v616, 4294901760
    %618 = vmatpush1.msra.mxu0 %v617
    %619 = vmatprep.subr.mxu0 0.0
    %620 = vmatpush1.msra.mxu0 0.0
    %621 = vmatprep.subr.mxu0 0.0
    %622 = vmatpush1.msra.mxu0 0.0
    %623 = vmatprep.subr.mxu0 0.0
    %624 = vmatpush1.msra.mxu0 0.0
    %625 = vmatprep.subr.mxu0 0.0
    %626 = vmatpush1.msra.mxu0 0.0
    %627 = vmatprep.subr.mxu0 0.0
    %628 = vmatpush1.msra.mxu0 0.0
    %629 = vmatprep.subr.mxu0 0.0
    %630 = vmatpush1.msra.mxu0 0.0
    %631 = vmatprep.subr.mxu0 0.0
    %632 = vmatpush1.msra.mxu0 0.0
    %633 = vmatprep.subr.mxu0 0.0
    %634 = vmatpush1.msra.mxu0 0.0
    %635 = vmatprep.subr.mxu0 0.0
    %636 = vmatpush1.msra.mxu0 0.0
    %637 = vmatprep.subr.mxu0 0.0
    %638 = vmatpush1.msra.mxu0 0.0
    %639 = vmatprep.subr.mxu0 0.0
    %640 = vmatpush1.msra.mxu0 0.0
    %641 = vmatprep.subr.mxu0 0.0
    %642 = vmatpush1.msra.mxu0 0.0
    %643 = vmatprep.subr.mxu0 0.0
    %644 = vmatpush1.msra.mxu0 0.0
    %645 = vmatprep.subr.mxu0 0.0
    %646 = vmatpush1.msra.mxu0 0.0
    %647 = vmatprep.subr.mxu0 0.0
    %648 = vmatpush1.msra.mxu0 0.0
    %649 = vmatprep.subr.mxu0 0.0
    %650 = vmatpush1.msra.mxu0 0.0
    %651 = vmatprep.mubr.f32.mxu0 0.0
    %v652 = vand.u32 %v48, 4294901760
    %653 = vmatmul.mubr.f32.gmra.mrb[0].mxu0 %v652
    %v654 = vpop.f32.mrb[0].mxu0
    %v655 = vadd.f32 %v528, %v654
    %v656 = vpop.f32.mrb[0].mxu0
    %657 = vmatprep.mubr.f32.mxu0 0.0
    %v658 = vand.u32 %v49, 4294901760
    %659 = vmatmul.mubr.f32.gmra.mrb[0].mxu0 %v658
    %v660 = vpop.f32.mrb[0].mxu0
    %v661 = vadd.f32 %v536, %v660
    %v662 = vpop.f32.mrb[0].mxu0
    %663 = vdwg.mxu0
    %664 = vmatprep.subr.mxu0 0.0
    %v665 = vand.u32 %v50, 4294901760
    %666 = vmatpush1.msra.mxu0 %v665
    %667 = vmatprep.subr.mxu0 0.0
    %v668 = vand.u32 %v51, 4294901760
    %669 = vmatpush1.msra.mxu0 %v668
    %670 = vmatprep.subr.mxu0 0.0
    %v671 = vand.u32 %v52, 4294901760
    %672 = vmatpush1.msra.mxu0 %v671
    %673 = vmatprep.subr.mxu0 0.0
    %v674 = vand.u32 %v53, 4294901760
    %675 = vmatpush1.msra.mxu0 %v674
    %676 = vmatprep.subr.mxu0 0.0
    %v677 = vand.u32 %v54, 4294901760
    %678 = vmatpush1.msra.mxu0 %v677
    %679 = vmatprep.subr.mxu0 0.0
    %v680 = vand.u32 %v55, 4294901760
    %681 = vmatpush1.msra.mxu0 %v680
    %682 = vmatprep.subr.mxu0 0.0
    %v683 = vand.u32 %v56, 4294901760
    %684 = vmatpush1.msra.mxu0 %v683
    %685 = vmatprep.subr.mxu0 0.0
    %v686 = vand.u32 %v57, 4294901760
    %687 = vmatpush1.msra.mxu0 %v686
    %688 = vmatprep.subr.mxu0 0.0
    %v689 = vand.u32 %v58, 4294901760
    %690 = vmatpush1.msra.mxu0 %v689
    %691 = vmatprep.subr.mxu0 0.0
    %v692 = vand.u32 %v59, 4294901760
    %693 = vmatpush1.msra.mxu0 %v692
    %694 = vmatprep.subr.mxu0 0.0
    %v695 = vand.u32 %v60, 4294901760
    %696 = vmatpush1.msra.mxu0 %v695
    %697 = vmatprep.subr.mxu0 0.0
    %v698 = vand.u32 %v61, 4294901760
    %699 = vmatpush1.msra.mxu0 %v698
    %700 = vmatprep.subr.mxu0 0.0
    %v701 = vand.u32 %v62, 4294901760
    %702 = vmatpush1.msra.mxu0 %v701
    %703 = vmatprep.subr.mxu0 0.0
    %v704 = vand.u32 %v63, 4294901760
    %705 = vmatpush1.msra.mxu0 %v704
    %706 = vmatprep.subr.mxu0 0.0
    %v707 = vand.u32 %v64, 4294901760
    %708 = vmatpush1.msra.mxu0 %v707
    %709 = vmatprep.subr.mxu0 0.0
    %v710 = vand.u32 %v65, 4294901760
    %711 = vmatpush1.msra.mxu0 %v710
    %712 = vmatprep.subr.mxu0 0.0
    %713 = vmatpush1.msra.mxu0 0.0
    %714 = vmatprep.subr.mxu0 0.0
    %715 = vmatpush1.msra.mxu0 0.0
    %716 = vmatprep.subr.mxu0 0.0
    %717 = vmatpush1.msra.mxu0 0.0
    %718 = vmatprep.subr.mxu0 0.0
    %719 = vmatpush1.msra.mxu0 0.0
    %720 = vmatprep.subr.mxu0 0.0
    %721 = vmatpush1.msra.mxu0 0.0
    %722 = vmatprep.subr.mxu0 0.0
    %723 = vmatpush1.msra.mxu0 0.0
    %724 = vmatprep.subr.mxu0 0.0
    %725 = vmatpush1.msra.mxu0 0.0
    %726 = vmatprep.subr.mxu0 0.0
    %727 = vmatpush1.msra.mxu0 0.0
    %728 = vmatprep.subr.mxu0 0.0
    %729 = vmatpush1.msra.mxu0 0.0
    %730 = vmatprep.subr.mxu0 0.0
    %731 = vmatpush1.msra.mxu0 0.0
    %732 = vmatprep.subr.mxu0 0.0
    %733 = vmatpush1.msra.mxu0 0.0
    %734 = vmatprep.subr.mxu0 0.0
    %735 = vmatpush1.msra.mxu0 0.0
    %736 = vmatprep.subr.mxu0 0.0
    %737 = vmatpush1.msra.mxu0 0.0
    %738 = vmatprep.subr.mxu0 0.0
    %739 = vmatpush1.msra.mxu0 0.0
    %740 = vmatprep.subr.mxu0 0.0
    %741 = vmatpush1.msra.mxu0 0.0
    %742 = vmatprep.subr.mxu0 0.0
    %743 = vmatpush1.msra.mxu0 0.0
    %744 = vmatprep.mubr.f32.mxu0 0.0
    %v745 = vand.u32 %v48, 4294901760
    %746 = vmatmul.mubr.f32.gmra.mrb[0].mxu0 %v745
    %v747 = vpop.f32.mrb[0].mxu0
    %v748 = vadd.f32 %v655, %v747
    %v749 = vpop.f32.mrb[0].mxu0
    %750 = vmatprep.mubr.f32.mxu0 0.0
    %v751 = vand.u32 %v49, 4294901760
    %752 = vmatmul.mubr.f32.gmra.mrb[0].mxu0 %v751
    %v753 = vpop.f32.mrb[0].mxu0
    %v754 = vadd.f32 %v661, %v753
    %v755 = vpop.f32.mrb[0].mxu0
    %756 = vdwg.mxu0
    %v757 = vmul.f32 %v748, 0.5
    %v758 = vmul.f32 %v754, 0.5
    %v759 = vmul.f32 %v748, 0.70710677
    %v760 = vmul.f32 %v754, 0.70710677
    %v761 = verf.f32.pop %v759
    %v762 = verf.f32.pop %v760
    %v763 = vadd.f32 %v761, 1.0
    %v764 = vadd.f32 %v762, 1.0
    %v765 = vmul.f32 %v757, %v763
    %v766 = vmul.f32 %v758, %v764
    %v767 = vld [vmem:[#allocation4] sm:$0xff]
    %v768 = vld [vmem:[#allocation4 + $0x8] sm:$0xff]
    %v769 = vld [vmem:[#allocation4 + $0x10] sm:$0xff]
    %v770 = vld [vmem:[#allocation4 + $0x18] sm:$0xff]
    %v771 = vld [vmem:[#allocation4 + $0x20] sm:$0xff]
    %v772 = vld [vmem:[#allocation4 + $0x28] sm:$0xff]
    %v773 = vld [vmem:[#allocation4 + $0x30] sm:$0xff]
    %v774 = vld [vmem:[#allocation4 + $0x38] sm:$0xff]
    %v775 = vld [vmem:[#allocation4 + $0x40] sm:$0xff]
    %v776 = vld [vmem:[#allocation4 + $0x48] sm:$0xff]
    %v777 = vld [vmem:[#allocation4 + $0x50] sm:$0xff]
    %v778 = vld [vmem:[#allocation4 + $0x58] sm:$0xff]
    %v779 = vld [vmem:[#allocation4 + $0x60] sm:$0xff]
    %v780 = vld [vmem:[#allocation4 + $0x68] sm:$0xff]
    %v781 = vld [vmem:[#allocation4 + $0x70] sm:$0xff]
    %v782 = vld [vmem:[#allocation4 + $0x78] sm:$0xff]
    %v783 = vld [vmem:[%s4] sm:$0x1]
    %v785 = vlaneseq
    %v786 = vshrl.u32 %v785, 7
    %v787 = vsub.s32 0, %v786
    %v788 = vrot.slane %v783, %v787
    %790 = vmatprep.subr.mxu0 0.0
    %v791 = vand.u32 %v767, 4294901760
    %792 = vmatpush1.msra.mxu0 %v791
    %793 = vmatprep.subr.mxu0 0.0
    %v794 = vand.u32 %v768, 4294901760
    %795 = vmatpush1.msra.mxu0 %v794
    %796 = vmatprep.subr.mxu0 0.0
    %v797 = vand.u32 %v769, 4294901760
    %798 = vmatpush1.msra.mxu0 %v797
    %799 = vmatprep.subr.mxu0 0.0
    %v800 = vand.u32 %v770, 4294901760
    %801 = vmatpush1.msra.mxu0 %v800
    %802 = vmatprep.subr.mxu0 0.0
    %v803 = vand.u32 %v771, 4294901760
    %804 = vmatpush1.msra.mxu0 %v803
    %805 = vmatprep.subr.mxu0 0.0
    %v806 = vand.u32 %v772, 4294901760
    %807 = vmatpush1.msra.mxu0 %v806
    %808 = vmatprep.subr.mxu0 0.0
    %v809 = vand.u32 %v773, 4294901760
    %810 = vmatpush1.msra.mxu0 %v809
    %811 = vmatprep.subr.mxu0 0.0
    %v812 = vand.u32 %v774, 4294901760
    %813 = vmatpush1.msra.mxu0 %v812
    %814 = vmatprep.subr.mxu0 0.0
    %v815 = vand.u32 %v775, 4294901760
    %816 = vmatpush1.msra.mxu0 %v815
    %817 = vmatprep.subr.mxu0 0.0
    %v818 = vand.u32 %v776, 4294901760
    %819 = vmatpush1.msra.mxu0 %v818
    %820 = vmatprep.subr.mxu0 0.0
    %v821 = vand.u32 %v777, 4294901760
    %822 = vmatpush1.msra.mxu0 %v821
    %823 = vmatprep.subr.mxu0 0.0
    %v824 = vand.u32 %v778, 4294901760
    %825 = vmatpush1.msra.mxu0 %v824
    %826 = vmatprep.subr.mxu0 0.0
    %v827 = vand.u32 %v779, 4294901760
    %828 = vmatpush1.msra.mxu0 %v827
    %829 = vmatprep.subr.mxu0 0.0
    %v830 = vand.u32 %v780, 4294901760
    %831 = vmatpush1.msra.mxu0 %v830
    %832 = vmatprep.subr.mxu0 0.0
    %v833 = vand.u32 %v781, 4294901760
    %834 = vmatpush1.msra.mxu0 %v833
    %835 = vmatprep.subr.mxu0 0.0
    %v836 = vand.u32 %v782, 4294901760
    %837 = vmatpush1.msra.mxu0 %v836
    %838 = vmatprep.subr.mxu0 0.0
    %839 = vmatpush1.msra.mxu0 0.0
    %840 = vmatprep.subr.mxu0 0.0
    %841 = vmatpush1.msra.mxu0 0.0
    %842 = vmatprep.subr.mxu0 0.0
    %843 = vmatpush1.msra.mxu0 0.0
    %844 = vmatprep.subr.mxu0 0.0
    %845 = vmatpush1.msra.mxu0 0.0
    %846 = vmatprep.subr.mxu0 0.0
    %847 = vmatpush1.msra.mxu0 0.0
    %848 = vmatprep.subr.mxu0 0.0
    %849 = vmatpush1.msra.mxu0 0.0
    %850 = vmatprep.subr.mxu0 0.0
    %851 = vmatpush1.msra.mxu0 0.0
    %852 = vmatprep.subr.mxu0 0.0
    %853 = vmatpush1.msra.mxu0 0.0
    %854 = vmatprep.subr.mxu0 0.0
    %855 = vmatpush1.msra.mxu0 0.0
    %856 = vmatprep.subr.mxu0 0.0
    %857 = vmatpush1.msra.mxu0 0.0
    %858 = vmatprep.subr.mxu0 0.0
    %859 = vmatpush1.msra.mxu0 0.0
    %860 = vmatprep.subr.mxu0 0.0
    %861 = vmatpush1.msra.mxu0 0.0
    %862 = vmatprep.subr.mxu0 0.0
    %863 = vmatpush1.msra.mxu0 0.0
    %864 = vmatprep.subr.mxu0 0.0
    %865 = vmatpush1.msra.mxu0 0.0
    %866 = vmatprep.subr.mxu0 0.0
    %867 = vmatpush1.msra.mxu0 0.0
    %868 = vmatprep.subr.mxu0 0.0
    %869 = vmatpush1.msra.mxu0 0.0
    %870 = vmatprep.mubr.f32.mxu0 0.0
    %v871 = vand.u32 %v765, 4294901760
    %v872 = vsub.f32 %v765, %v871
    %v873 = vand.u32 %v872, 4294901760
    %v874 = vsub.f32 %v872, %v873
    %v875 = vand.u32 %v874, 4294901760
    %876 = vmatmul.mubr.f32.gmra.mrb[0].mxu0 %v875
    %v877 = vpop.f32.mrb[0].mxu0
    %v878 = vadd.f32 %v788, %v877
    %v879 = vpop.f32.mrb[0].mxu0
    %880 = vmatprep.mubr.f32.mxu0 0.0
    %v881 = vand.u32 %v766, 4294901760
    %v882 = vsub.f32 %v766, %v881
    %v883 = vand.u32 %v882, 4294901760
    %v884 = vsub.f32 %v882, %v883
    %v885 = vand.u32 %v884, 4294901760
    %886 = vmatmul.mubr.f32.gmra.mrb[0].mxu0 %v885
    %v887 = vpop.f32.mrb[0].mxu0
    %v888 = vadd.f32 %v788, %v887
    %v889 = vpop.f32.mrb[0].mxu0
    %890 = vdwg.mxu0
    %891 = vmatprep.subr.mxu0 0.0
    %v892 = vand.u32 %v767, 4294901760
    %v893 = vsub.f32 %v767, %v892
    %v894 = vand.u32 %v893, 4294901760
    %v895 = vsub.f32 %v893, %v894
    %v896 = vand.u32 %v895, 4294901760
    %897 = vmatpush1.msra.mxu0 %v896
    %898 = vmatprep.subr.mxu0 0.0
    %v899 = vand.u32 %v768, 4294901760
    %v900 = vsub.f32 %v768, %v899
    %v901 = vand.u32 %v900, 4294901760
    %v902 = vsub.f32 %v900, %v901
    %v903 = vand.u32 %v902, 4294901760
    %904 = vmatpush1.msra.mxu0 %v903
    %905 = vmatprep.subr.mxu0 0.0
    %v906 = vand.u32 %v769, 4294901760
    %v907 = vsub.f32 %v769, %v906
    %v908 = vand.u32 %v907, 4294901760
    %v909 = vsub.f32 %v907, %v908
    %v910 = vand.u32 %v909, 4294901760
    %911 = vmatpush1.msra.mxu0 %v910
    %912 = vmatprep.subr.mxu0 0.0
    %v913 = vand.u32 %v770, 4294901760
    %v914 = vsub.f32 %v770, %v913
    %v915 = vand.u32 %v914, 4294901760
    %v916 = vsub.f32 %v914, %v915
    %v917 = vand.u32 %v916, 4294901760
    %918 = vmatpush1.msra.mxu0 %v917
    %919 = vmatprep.subr.mxu0 0.0
    %v920 = vand.u32 %v771, 4294901760
    %v921 = vsub.f32 %v771, %v920
    %v922 = vand.u32 %v921, 4294901760
    %v923 = vsub.f32 %v921, %v922
    %v924 = vand.u32 %v923, 4294901760
    %925 = vmatpush1.msra.mxu0 %v924
    %926 = vmatprep.subr.mxu0 0.0
    %v927 = vand.u32 %v772, 4294901760
    %v928 = vsub.f32 %v772, %v927
    %v929 = vand.u32 %v928, 4294901760
    %v930 = vsub.f32 %v928, %v929
    %v931 = vand.u32 %v930, 4294901760
    %932 = vmatpush1.msra.mxu0 %v931
    %933 = vmatprep.subr.mxu0 0.0
    %v934 = vand.u32 %v773, 4294901760
    %v935 = vsub.f32 %v773, %v934
    %v936 = vand.u32 %v935, 4294901760
    %v937 = vsub.f32 %v935, %v936
    %v938 = vand.u32 %v937, 4294901760
    %939 = vmatpush1.msra.mxu0 %v938
    %940 = vmatprep.subr.mxu0 0.0
    %v941 = vand.u32 %v774, 4294901760
    %v942 = vsub.f32 %v774, %v941
    %v943 = vand.u32 %v942, 4294901760
    %v944 = vsub.f32 %v942, %v943
    %v945 = vand.u32 %v944, 4294901760
    %946 = vmatpush1.msra.mxu0 %v945
    %947 = vmatprep.subr.mxu0 0.0
    %v948 = vand.u32 %v775, 4294901760
    %v949 = vsub.f32 %v775, %v948
    %v950 = vand.u32 %v949, 4294901760
    %v951 = vsub.f32 %v949, %v950
    %v952 = vand.u32 %v951, 4294901760
    %953 = vmatpush1.msra.mxu0 %v952
    %954 = vmatprep.subr.mxu0 0.0
    %v955 = vand.u32 %v776, 4294901760
    %v956 = vsub.f32 %v776, %v955
    %v957 = vand.u32 %v956, 4294901760
    %v958 = vsub.f32 %v956, %v957
    %v959 = vand.u32 %v958, 4294901760
    %960 = vmatpush1.msra.mxu0 %v959
    %961 = vmatprep.subr.mxu0 0.0
    %v962 = vand.u32 %v777, 4294901760
    %v963 = vsub.f32 %v777, %v962
    %v964 = vand.u32 %v963, 4294901760
    %v965 = vsub.f32 %v963, %v964
    %v966 = vand.u32 %v965, 4294901760
    %967 = vmatpush1.msra.mxu0 %v966
    %968 = vmatprep.subr.mxu0 0.0
    %v969 = vand.u32 %v778, 4294901760
    %v970 = vsub.f32 %v778, %v969
    %v971 = vand.u32 %v970, 4294901760
    %v972 = vsub.f32 %v970, %v971
    %v973 = vand.u32 %v972, 4294901760
    %974 = vmatpush1.msra.mxu0 %v973
    %975 = vmatprep.subr.mxu0 0.0
    %v976 = vand.u32 %v779, 4294901760
    %v977 = vsub.f32 %v779, %v976
    %v978 = vand.u32 %v977, 4294901760
    %v979 = vsub.f32 %v977, %v978
    %v980 = vand.u32 %v979, 4294901760
    %981 = vmatpush1.msra.mxu0 %v980
    %982 = vmatprep.subr.mxu0 0.0
    %v983 = vand.u32 %v780, 4294901760
    %v984 = vsub.f32 %v780, %v983
    %v985 = vand.u32 %v984, 4294901760
    %v986 = vsub.f32 %v984, %v985
    %v987 = vand.u32 %v986, 4294901760
    %988 = vmatpush1.msra.mxu0 %v987
    %989 = vmatprep.subr.mxu0 0.0
    %v990 = vand.u32 %v781, 4294901760
    %v991 = vsub.f32 %v781, %v990
    %v992 = vand.u32 %v991, 4294901760
    %v993 = vsub.f32 %v991, %v992
    %v994 = vand.u32 %v993, 4294901760
    %995 = vmatpush1.msra.mxu0 %v994
    %996 = vmatprep.subr.mxu0 0.0
    %v997 = vand.u32 %v782, 4294901760
    %v998 = vsub.f32 %v782, %v997
    %v999 = vand.u32 %v998, 4294901760
    %v1000 = vsub.f32 %v998, %v999
    %v1001 = vand.u32 %v1000, 4294901760
    %1002 = vmatpush1.msra.mxu0 %v1001
    %1003 = vmatprep.subr.mxu0 0.0
    %1004 = vmatpush1.msra.mxu0 0.0
    %1005 = vmatprep.subr.mxu0 0.0
    %1006 = vmatpush1.msra.mxu0 0.0
    %1007 = vmatprep.subr.mxu0 0.0
    %1008 = vmatpush1.msra.mxu0 0.0
    %1009 = vmatprep.subr.mxu0 0.0
    %1010 = vmatpush1.msra.mxu0 0.0
    %1011 = vmatprep.subr.mxu0 0.0
    %1012 = vmatpush1.msra.mxu0 0.0
    %1013 = vmatprep.subr.mxu0 0.0
    %1014 = vmatpush1.msra.mxu0 0.0
    %1015 = vmatprep.subr.mxu0 0.0
    %1016 = vmatpush1.msra.mxu0 0.0
    %1017 = vmatprep.subr.mxu0 0.0
    %1018 = vmatpush1.msra.mxu0 0.0
    %1019 = vmatprep.subr.mxu0 0.0
    %1020 = vmatpush1.msra.mxu0 0.0
    %1021 = vmatprep.subr.mxu0 0.0
    %1022 = vmatpush1.msra.mxu0 0.0
    %1023 = vmatprep.subr.mxu0 0.0
    %1024 = vmatpush1.msra.mxu0 0.0
    %1025 = vmatprep.subr.mxu0 0.0
    %1026 = vmatpush1.msra.mxu0 0.0
    %1027 = vmatprep.subr.mxu0 0.0
    %1028 = vmatpush1.msra.mxu0 0.0
    %1029 = vmatprep.subr.mxu0 0.0
    %1030 = vmatpush1.msra.mxu0 0.0
    %1031 = vmatprep.subr.mxu0 0.0
    %1032 = vmatpush1.msra.mxu0 0.0
    %1033 = vmatprep.subr.mxu0 0.0
    %1034 = vmatpush1.msra.mxu0 0.0
    %1035 = vmatprep.mubr.f32.mxu0 0.0
    %v1036 = vand.u32 %v765, 4294901760
    %1037 = vmatmul.mubr.f32.gmra.mrb[0].mxu0 %v1036
    %v1038 = vpop.f32.mrb[0].mxu0
    %v1039 = vadd.f32 %v878, %v1038
    %v1040 = vpop.f32.mrb[0].mxu0
    %1041 = vmatprep.mubr.f32.mxu0 0.0
    %v1042 = vand.u32 %v766, 4294901760
    %1043 = vmatmul.mubr.f32.gmra.mrb[0].mxu0 %v1042
    %v1044 = vpop.f32.mrb[0].mxu0
    %v1045 = vadd.f32 %v888, %v1044
    %v1046 = vpop.f32.mrb[0].mxu0
    %1047 = vdwg.mxu0
    %1048 = vmatprep.subr.mxu0 0.0
    %v1049 = vand.u32 %v767, 4294901760
    %v1050 = vsub.f32 %v767, %v1049
    %1051 = vmatpush1.msra.mxu0 %v1050
    %1052 = vmatprep.subr.mxu0 0.0
    %v1053 = vand.u32 %v768, 4294901760
    %v1054 = vsub.f32 %v768, %v1053
    %1055 = vmatpush1.msra.mxu0 %v1054
    %1056 = vmatprep.subr.mxu0 0.0
    %v1057 = vand.u32 %v769, 4294901760
    %v1058 = vsub.f32 %v769, %v1057
    %1059 = vmatpush1.msra.mxu0 %v1058
    %1060 = vmatprep.subr.mxu0 0.0
    %v1061 = vand.u32 %v770, 4294901760
    %v1062 = vsub.f32 %v770, %v1061
    %1063 = vmatpush1.msra.mxu0 %v1062
    %1064 = vmatprep.subr.mxu0 0.0
    %v1065 = vand.u32 %v771, 4294901760
    %v1066 = vsub.f32 %v771, %v1065
    %1067 = vmatpush1.msra.mxu0 %v1066
    %1068 = vmatprep.subr.mxu0 0.0
    %v1069 = vand.u32 %v772, 4294901760
    %v1070 = vsub.f32 %v772, %v1069
    %1071 = vmatpush1.msra.mxu0 %v1070
    %1072 = vmatprep.subr.mxu0 0.0
    %v1073 = vand.u32 %v773, 4294901760
    %v1074 = vsub.f32 %v773, %v1073
    %1075 = vmatpush1.msra.mxu0 %v1074
    %1076 = vmatprep.subr.mxu0 0.0
    %v1077 = vand.u32 %v774, 4294901760
    %v1078 = vsub.f32 %v774, %v1077
    %1079 = vmatpush1.msra.mxu0 %v1078
    %1080 = vmatprep.subr.mxu0 0.0
    %v1081 = vand.u32 %v775, 4294901760
    %v1082 = vsub.f32 %v775, %v1081
    %1083 = vmatpush1.msra.mxu0 %v1082
    %1084 = vmatprep.subr.mxu0 0.0
    %v1085 = vand.u32 %v776, 4294901760
    %v1086 = vsub.f32 %v776, %v1085
    %1087 = vmatpush1.msra.mxu0 %v1086
    %1088 = vmatprep.subr.mxu0 0.0
    %v1089 = vand.u32 %v777, 4294901760
    %v1090 = vsub.f32 %v777, %v1089
    %1091 = vmatpush1.msra.mxu0 %v1090
    %1092 = vmatprep.subr.mxu0 0.0
    %v1093 = vand.u32 %v778, 4294901760
    %v1094 = vsub.f32 %v778, %v1093
    %1095 = vmatpush1.msra.mxu0 %v1094
    %1096 = vmatprep.subr.mxu0 0.0
    %v1097 = vand.u32 %v779, 4294901760
    %v1098 = vsub.f32 %v779, %v1097
    %1099 = vmatpush1.msra.mxu0 %v1098
    %1100 = vmatprep.subr.mxu0 0.0
    %v1101 = vand.u32 %v780, 4294901760
    %v1102 = vsub.f32 %v780, %v1101
    %1103 = vmatpush1.msra.mxu0 %v1102
    %1104 = vmatprep.subr.mxu0 0.0
    %v1105 = vand.u32 %v781, 4294901760
    %v1106 = vsub.f32 %v781, %v1105
    %1107 = vmatpush1.msra.mxu0 %v1106
    %1108 = vmatprep.subr.mxu0 0.0
    %v1109 = vand.u32 %v782, 4294901760
    %v1110 = vsub.f32 %v782, %v1109
    %1111 = vmatpush1.msra.mxu0 %v1110
    %1112 = vmatprep.subr.mxu0 0.0
    %1113 = vmatpush1.msra.mxu0 0.0
    %1114 = vmatprep.subr.mxu0 0.0
    %1115 = vmatpush1.msra.mxu0 0.0
    %1116 = vmatprep.subr.mxu0 0.0
    %1117 = vmatpush1.msra.mxu0 0.0
    %1118 = vmatprep.subr.mxu0 0.0
    %1119 = vmatpush1.msra.mxu0 0.0
    %1120 = vmatprep.subr.mxu0 0.0
    %1121 = vmatpush1.msra.mxu0 0.0
    %1122 = vmatprep.subr.mxu0 0.0
    %1123 = vmatpush1.msra.mxu0 0.0
    %1124 = vmatprep.subr.mxu0 0.0
    %1125 = vmatpush1.msra.mxu0 0.0
    %1126 = vmatprep.subr.mxu0 0.0
    %1127 = vmatpush1.msra.mxu0 0.0
    %1128 = vmatprep.subr.mxu0 0.0
    %1129 = vmatpush1.msra.mxu0 0.0
    %1130 = vmatprep.subr.mxu0 0.0
    %1131 = vmatpush1.msra.mxu0 0.0
    %1132 = vmatprep.subr.mxu0 0.0
    %1133 = vmatpush1.msra.mxu0 0.0
    %1134 = vmatprep.subr.mxu0 0.0
    %1135 = vmatpush1.msra.mxu0 0.0
    %1136 = vmatprep.subr.mxu0 0.0
    %1137 = vmatpush1.msra.mxu0 0.0
    %1138 = vmatprep.subr.mxu0 0.0
    %1139 = vmatpush1.msra.mxu0 0.0
    %1140 = vmatprep.subr.mxu0 0.0
    %1141 = vmatpush1.msra.mxu0 0.0
    %1142 = vmatprep.subr.mxu0 0.0
    %1143 = vmatpush1.msra.mxu0 0.0
    %1144 = vmatprep.mubr.f32.mxu0 0.0
    %v1145 = vand.u32 %v765, 4294901760
    %v1146 = vsub.f32 %v765, %v1145
    %1147 = vmatmul.mubr.f32.gmra.mrb[0].mxu0 %v1146
    %v1148 = vpop.f32.mrb[0].mxu0
    %v1149 = vadd.f32 %v1039, %v1148
    %v1150 = vpop.f32.mrb[0].mxu0
    %1151 = vmatprep.mubr.f32.mxu0 0.0
    %v1152 = vand.u32 %v766, 4294901760
    %v1153 = vsub.f32 %v766, %v1152
    %1154 = vmatmul.mubr.f32.gmra.mrb[0].mxu0 %v1153
    %v1155 = vpop.f32.mrb[0].mxu0
    %v1156 = vadd.f32 %v1045, %v1155
    %v1157 = vpop.f32.mrb[0].mxu0
    %1158 = vdwg.mxu0
    %1159 = vmatprep.subr.mxu0 0.0
    %v1160 = vand.u32 %v767, 4294901760
    %1161 = vmatpush1.msra.mxu0 %v1160
    %1162 = vmatprep.subr.mxu0 0.0
    %v1163 = vand.u32 %v768, 4294901760
    %1164 = vmatpush1.msra.mxu0 %v1163
    %1165 = vmatprep.subr.mxu0 0.0
    %v1166 = vand.u32 %v769, 4294901760
    %1167 = vmatpush1.msra.mxu0 %v1166
    %1168 = vmatprep.subr.mxu0 0.0
    %v1169 = vand.u32 %v770, 4294901760
    %1170 = vmatpush1.msra.mxu0 %v1169
    %1171 = vmatprep.subr.mxu0 0.0
    %v1172 = vand.u32 %v771, 4294901760
    %1173 = vmatpush1.msra.mxu0 %v1172
    %1174 = vmatprep.subr.mxu0 0.0
    %v1175 = vand.u32 %v772, 4294901760
    %1176 = vmatpush1.msra.mxu0 %v1175
    %1177 = vmatprep.subr.mxu0 0.0
    %v1178 = vand.u32 %v773, 4294901760
    %1179 = vmatpush1.msra.mxu0 %v1178
    %1180 = vmatprep.subr.mxu0 0.0
    %v1181 = vand.u32 %v774, 4294901760
    %1182 = vmatpush1.msra.mxu0 %v1181
    %1183 = vmatprep.subr.mxu0 0.0
    %v1184 = vand.u32 %v775, 4294901760
    %1185 = vmatpush1.msra.mxu0 %v1184
    %1186 = vmatprep.subr.mxu0 0.0
    %v1187 = vand.u32 %v776, 4294901760
    %1188 = vmatpush1.msra.mxu0 %v1187
    %1189 = vmatprep.subr.mxu0 0.0
    %v1190 = vand.u32 %v777, 4294901760
    %1191 = vmatpush1.msra.mxu0 %v1190
    %1192 = vmatprep.subr.mxu0 0.0
    %v1193 = vand.u32 %v778, 4294901760
    %1194 = vmatpush1.msra.mxu0 %v1193
    %1195 = vmatprep.subr.mxu0 0.0
    %v1196 = vand.u32 %v779, 4294901760
    %1197 = vmatpush1.msra.mxu0 %v1196
    %1198 = vmatprep.subr.mxu0 0.0
    %v1199 = vand.u32 %v780, 4294901760
    %1200 = vmatpush1.msra.mxu0 %v1199
    %1201 = vmatprep.subr.mxu0 0.0
    %v1202 = vand.u32 %v781, 4294901760
    %1203 = vmatpush1.msra.mxu0 %v1202
    %1204 = vmatprep.subr.mxu0 0.0
    %v1205 = vand.u32 %v782, 4294901760
    %1206 = vmatpush1.msra.mxu0 %v1205
    %1207 = vmatprep.subr.mxu0 0.0
    %1208 = vmatpush1.msra.mxu0 0.0
    %1209 = vmatprep.subr.mxu0 0.0
    %1210 = vmatpush1.msra.mxu0 0.0
    %1211 = vmatprep.subr.mxu0 0.0
    %1212 = vmatpush1.msra.mxu0 0.0
    %1213 = vmatprep.subr.mxu0 0.0
    %1214 = vmatpush1.msra.mxu0 0.0
    %1215 = vmatprep.subr.mxu0 0.0
    %1216 = vmatpush1.msra.mxu0 0.0
    %1217 = vmatprep.subr.mxu0 0.0
    %1218 = vmatpush1.msra.mxu0 0.0
    %1219 = vmatprep.subr.mxu0 0.0
    %1220 = vmatpush1.msra.mxu0 0.0
    %1221 = vmatprep.subr.mxu0 0.0
    %1222 = vmatpush1.msra.mxu0 0.0
    %1223 = vmatprep.subr.mxu0 0.0
    %1224 = vmatpush1.msra.mxu0 0.0
    %1225 = vmatprep.subr.mxu0 0.0
    %1226 = vmatpush1.msra.mxu0 0.0
    %1227 = vmatprep.subr.mxu0 0.0
    %1228 = vmatpush1.msra.mxu0 0.0
    %1229 = vmatprep.subr.mxu0 0.0
    %1230 = vmatpush1.msra.mxu0 0.0
    %1231 = vmatprep.subr.mxu0 0.0
    %1232 = vmatpush1.msra.mxu0 0.0
    %1233 = vmatprep.subr.mxu0 0.0
    %1234 = vmatpush1.msra.mxu0 0.0
    %1235 = vmatprep.subr.mxu0 0.0
    %1236 = vmatpush1.msra.mxu0 0.0
    %1237 = vmatprep.subr.mxu0 0.0
    %1238 = vmatpush1.msra.mxu0 0.0
    %1239 = vmatprep.mubr.f32.mxu0 0.0
    %v1240 = vand.u32 %v765, 4294901760
    %v1241 = vsub.f32 %v765, %v1240
    %v1242 = vand.u32 %v1241, 4294901760
    %1243 = vmatmul.mubr.f32.gmra.mrb[0].mxu0 %v1242
    %v1244 = vpop.f32.mrb[0].mxu0
    %v1245 = vadd.f32 %v1149, %v1244
    %v1246 = vpop.f32.mrb[0].mxu0
    %1247 = vmatprep.mubr.f32.mxu0 0.0
    %v1248 = vand.u32 %v766, 4294901760
    %v1249 = vsub.f32 %v766, %v1248
    %v1250 = vand.u32 %v1249, 4294901760
    %1251 = vmatmul.mubr.f32.gmra.mrb[0].mxu0 %v1250
    %v1252 = vpop.f32.mrb[0].mxu0
    %v1253 = vadd.f32 %v1156, %v1252
    %v1254 = vpop.f32.mrb[0].mxu0
    %1255 = vdwg.mxu0
    %1256 = vmatprep.subr.mxu0 0.0
    %v1257 = vand.u32 %v767, 4294901760
    %v1258 = vsub.f32 %v767, %v1257
    %v1259 = vand.u32 %v1258, 4294901760
    %1260 = vmatpush1.msra.mxu0 %v1259
    %1261 = vmatprep.subr.mxu0 0.0
    %v1262 = vand.u32 %v768, 4294901760
    %v1263 = vsub.f32 %v768, %v1262
    %v1264 = vand.u32 %v1263, 4294901760
    %1265 = vmatpush1.msra.mxu0 %v1264
    %1266 = vmatprep.subr.mxu0 0.0
    %v1267 = vand.u32 %v769, 4294901760
    %v1268 = vsub.f32 %v769, %v1267
    %v1269 = vand.u32 %v1268, 4294901760
    %1270 = vmatpush1.msra.mxu0 %v1269
    %1271 = vmatprep.subr.mxu0 0.0
    %v1272 = vand.u32 %v770, 4294901760
    %v1273 = vsub.f32 %v770, %v1272
    %v1274 = vand.u32 %v1273, 4294901760
    %1275 = vmatpush1.msra.mxu0 %v1274
    %1276 = vmatprep.subr.mxu0 0.0
    %v1277 = vand.u32 %v771, 4294901760
    %v1278 = vsub.f32 %v771, %v1277
    %v1279 = vand.u32 %v1278, 4294901760
    %1280 = vmatpush1.msra.mxu0 %v1279
    %1281 = vmatprep.subr.mxu0 0.0
    %v1282 = vand.u32 %v772, 4294901760
    %v1283 = vsub.f32 %v772, %v1282
    %v1284 = vand.u32 %v1283, 4294901760
    %1285 = vmatpush1.msra.mxu0 %v1284
    %1286 = vmatprep.subr.mxu0 0.0
    %v1287 = vand.u32 %v773, 4294901760
    %v1288 = vsub.f32 %v773, %v1287
    %v1289 = vand.u32 %v1288, 4294901760
    %1290 = vmatpush1.msra.mxu0 %v1289
    %1291 = vmatprep.subr.mxu0 0.0
    %v1292 = vand.u32 %v774, 4294901760
    %v1293 = vsub.f32 %v774, %v1292
    %v1294 = vand.u32 %v1293, 4294901760
    %1295 = vmatpush1.msra.mxu0 %v1294
    %1296 = vmatprep.subr.mxu0 0.0
    %v1297 = vand.u32 %v775, 4294901760
    %v1298 = vsub.f32 %v775, %v1297
    %v1299 = vand.u32 %v1298, 4294901760
    %1300 = vmatpush1.msra.mxu0 %v1299
    %1301 = vmatprep.subr.mxu0 0.0
    %v1302 = vand.u32 %v776, 4294901760
    %v1303 = vsub.f32 %v776, %v1302
    %v1304 = vand.u32 %v1303, 4294901760
    %1305 = vmatpush1.msra.mxu0 %v1304
    %1306 = vmatprep.subr.mxu0 0.0
    %v1307 = vand.u32 %v777, 4294901760
    %v1308 = vsub.f32 %v777, %v1307
    %v1309 = vand.u32 %v1308, 4294901760
    %1310 = vmatpush1.msra.mxu0 %v1309
    %1311 = vmatprep.subr.mxu0 0.0
    %v1312 = vand.u32 %v778, 4294901760
    %v1313 = vsub.f32 %v778, %v1312
    %v1314 = vand.u32 %v1313, 4294901760
    %1315 = vmatpush1.msra.mxu0 %v1314
    %1316 = vmatprep.subr.mxu0 0.0
    %v1317 = vand.u32 %v779, 4294901760
    %v1318 = vsub.f32 %v779, %v1317
    %v1319 = vand.u32 %v1318, 4294901760
    %1320 = vmatpush1.msra.mxu0 %v1319
    %1321 = vmatprep.subr.mxu0 0.0
    %v1322 = vand.u32 %v780, 4294901760
    %v1323 = vsub.f32 %v780, %v1322
    %v1324 = vand.u32 %v1323, 4294901760
    %1325 = vmatpush1.msra.mxu0 %v1324
    %1326 = vmatprep.subr.mxu0 0.0
    %v1327 = vand.u32 %v781, 4294901760
    %v1328 = vsub.f32 %v781, %v1327
    %v1329 = vand.u32 %v1328, 4294901760
    %1330 = vmatpush1.msra.mxu0 %v1329
    %1331 = vmatprep.subr.mxu0 0.0
    %v1332 = vand.u32 %v782, 4294901760
    %v1333 = vsub.f32 %v782, %v1332
    %v1334 = vand.u32 %v1333, 4294901760
    %1335 = vmatpush1.msra.mxu0 %v1334
    %1336 = vmatprep.subr.mxu0 0.0
    %1337 = vmatpush1.msra.mxu0 0.0
    %1338 = vmatprep.subr.mxu0 0.0
    %1339 = vmatpush1.msra.mxu0 0.0
    %1340 = vmatprep.subr.mxu0 0.0
    %1341 = vmatpush1.msra.mxu0 0.0
    %1342 = vmatprep.subr.mxu0 0.0
    %1343 = vmatpush1.msra.mxu0 0.0
    %1344 = vmatprep.subr.mxu0 0.0
    %1345 = vmatpush1.msra.mxu0 0.0
    %1346 = vmatprep.subr.mxu0 0.0
    %1347 = vmatpush1.msra.mxu0 0.0
    %1348 = vmatprep.subr.mxu0 0.0
    %1349 = vmatpush1.msra.mxu0 0.0
    %1350 = vmatprep.subr.mxu0 0.0
    %1351 = vmatpush1.msra.mxu0 0.0
    %1352 = vmatprep.subr.mxu0 0.0
    %1353 = vmatpush1.msra.mxu0 0.0
    %1354 = vmatprep.subr.mxu0 0.0
    %1355 = vmatpush1.msra.mxu0 0.0
    %1356 = vmatprep.subr.mxu0 0.0
    %1357 = vmatpush1.msra.mxu0 0.0
    %1358 = vmatprep.subr.mxu0 0.0
    %1359 = vmatpush1.msra.mxu0 0.0
    %1360 = vmatprep.subr.mxu0 0.0
    %1361 = vmatpush1.msra.mxu0 0.0
    %1362 = vmatprep.subr.mxu0 0.0
    %1363 = vmatpush1.msra.mxu0 0.0
    %1364 = vmatprep.subr.mxu0 0.0
    %1365 = vmatpush1.msra.mxu0 0.0
    %1366 = vmatprep.subr.mxu0 0.0
    %1367 = vmatpush1.msra.mxu0 0.0
    %1368 = vmatprep.mubr.f32.mxu0 0.0
    %v1369 = vand.u32 %v765, 4294901760
    %1370 = vmatmul.mubr.f32.gmra.mrb[0].mxu0 %v1369
    %v1371 = vpop.f32.mrb[0].mxu0
    %v1372 = vadd.f32 %v1245, %v1371
    %v1373 = vpop.f32.mrb[0].mxu0
    %1374 = vmatprep.mubr.f32.mxu0 0.0
    %v1375 = vand.u32 %v766, 4294901760
    %1376 = vmatmul.mubr.f32.gmra.mrb[0].mxu0 %v1375
    %v1377 = vpop.f32.mrb[0].mxu0
    %v1378 = vadd.f32 %v1253, %v1377
    %v1379 = vpop.f32.mrb[0].mxu0
    %1380 = vdwg.mxu0
    %1381 = vmatprep.subr.mxu0 0.0
    %v1382 = vand.u32 %v767, 4294901760
    %1383 = vmatpush1.msra.mxu0 %v1382
    %1384 = vmatprep.subr.mxu0 0.0
    %v1385 = vand.u32 %v768, 4294901760
    %1386 = vmatpush1.msra.mxu0 %v1385
    %1387 = vmatprep.subr.mxu0 0.0
    %v1388 = vand.u32 %v769, 4294901760
    %1389 = vmatpush1.msra.mxu0 %v1388
    %1390 = vmatprep.subr.mxu0 0.0
    %v1391 = vand.u32 %v770, 4294901760
    %1392 = vmatpush1.msra.mxu0 %v1391
    %1393 = vmatprep.subr.mxu0 0.0
    %v1394 = vand.u32 %v771, 4294901760
    %1395 = vmatpush1.msra.mxu0 %v1394
    %1396 = vmatprep.subr.mxu0 0.0
    %v1397 = vand.u32 %v772, 4294901760
    %1398 = vmatpush1.msra.mxu0 %v1397
    %1399 = vmatprep.subr.mxu0 0.0
    %v1400 = vand.u32 %v773, 4294901760
    %1401 = vmatpush1.msra.mxu0 %v1400
    %1402 = vmatprep.subr.mxu0 0.0
    %v1403 = vand.u32 %v774, 4294901760
    %1404 = vmatpush1.msra.mxu0 %v1403
    %1405 = vmatprep.subr.mxu0 0.0
    %v1406 = vand.u32 %v775, 4294901760
    %1407 = vmatpush1.msra.mxu0 %v1406
    %1408 = vmatprep.subr.mxu0 0.0
    %v1409 = vand.u32 %v776, 4294901760
    %1410 = vmatpush1.msra.mxu0 %v1409
    %1411 = vmatprep.subr.mxu0 0.0
    %v1412 = vand.u32 %v777, 4294901760
    %1413 = vmatpush1.msra.mxu0 %v1412
    %1414 = vmatprep.subr.mxu0 0.0
    %v1415 = vand.u32 %v778, 4294901760
    %1416 = vmatpush1.msra.mxu0 %v1415
    %1417 = vmatprep.subr.mxu0 0.0
    %v1418 = vand.u32 %v779, 4294901760
    %1419 = vmatpush1.msra.mxu0 %v1418
    %1420 = vmatprep.subr.mxu0 0.0
    %v1421 = vand.u32 %v780, 4294901760
    %1422 = vmatpush1.msra.mxu0 %v1421
    %1423 = vmatprep.subr.mxu0 0.0
    %v1424 = vand.u32 %v781, 4294901760
    %1425 = vmatpush1.msra.mxu0 %v1424
    %1426 = vmatprep.subr.mxu0 0.0
    %v1427 = vand.u32 %v782, 4294901760
    %1428 = vmatpush1.msra.mxu0 %v1427
    %1429 = vmatprep.subr.mxu0 0.0
    %1430 = vmatpush1.msra.mxu0 0.0
    %1431 = vmatprep.subr.mxu0 0.0
    %1432 = vmatpush1.msra.mxu0 0.0
    %1433 = vmatprep.subr.mxu0 0.0
    %1434 = vmatpush1.msra.mxu0 0.0
    %1435 = vmatprep.subr.mxu0 0.0
    %1436 = vmatpush1.msra.mxu0 0.0
    %1437 = vmatprep.subr.mxu0 0.0
    %1438 = vmatpush1.msra.mxu0 0.0
    %1439 = vmatprep.subr.mxu0 0.0
    %1440 = vmatpush1.msra.mxu0 0.0
    %1441 = vmatprep.subr.mxu0 0.0
    %1442 = vmatpush1.msra.mxu0 0.0
    %1443 = vmatprep.subr.mxu0 0.0
    %1444 = vmatpush1.msra.mxu0 0.0
    %1445 = vmatprep.subr.mxu0 0.0
    %1446 = vmatpush1.msra.mxu0 0.0
    %1447 = vmatprep.subr.mxu0 0.0
    %1448 = vmatpush1.msra.mxu0 0.0
    %1449 = vmatprep.subr.mxu0 0.0
    %1450 = vmatpush1.msra.mxu0 0.0
    %1451 = vmatprep.subr.mxu0 0.0
    %1452 = vmatpush1.msra.mxu0 0.0
    %1453 = vmatprep.subr.mxu0 0.0
    %1454 = vmatpush1.msra.mxu0 0.0
    %1455 = vmatprep.subr.mxu0 0.0
    %1456 = vmatpush1.msra.mxu0 0.0
    %1457 = vmatprep.subr.mxu0 0.0
    %1458 = vmatpush1.msra.mxu0 0.0
    %1459 = vmatprep.subr.mxu0 0.0
    %1460 = vmatpush1.msra.mxu0 0.0
    %1461 = vmatprep.mubr.f32.mxu0 0.0
    %v1462 = vand.u32 %v765, 4294901760
    %1463 = vmatmul.mubr.f32.gmra.mrb[0].mxu0 %v1462
    %v1464 = vpop.f32.mrb[0].mxu0
    %v1465 = vadd.f32 %v1372, %v1464
    %v1466 = vpop.f32.mrb[0].mxu0
    %1467 = vmatprep.mubr.f32.mxu0 0.0
    %v1468 = vand.u32 %v766, 4294901760
    %1469 = vmatmul.mubr.f32.gmra.mrb[0].mxu0 %v1468
    %v1470 = vpop.f32.mrb[0].mxu0
    %v1471 = vadd.f32 %v1378, %v1470
    %v1472 = vpop.f32.mrb[0].mxu0
    %1473 = vdwg.mxu0
    %1474 = vst [vmem:[%s5] sm:$0xff] %v1465
    %1475 = vst [vmem:[%s5 + $0x8] sm:$0xff] %v1471
    // Predicated region
    $region30: #{_mlp_forward_padded.1} parent=1 // pred_check
      _
    $region31: #{_mlp_forward_padded.1} parent=1 // pred_check_branch
      %1477 = sbr.rel (0) target = $region33
    $region32: #{_mlp_forward_padded.1} parent=1 // pred_region
      _
    $region33: #{_mlp_forward_padded.1} parent=1 // pred_fallthru
      _
    // Predicated region
    $region34: #{_mlp_forward_padded.1} parent=1 // pred_check
      _
    $region35: #{_mlp_forward_padded.1} parent=1 // pred_check_branch
      %1479 = sbr.rel (0) target = $region37
    $region36: #{_mlp_forward_padded.1} parent=1 // pred_region
      _
    $region37: #{_mlp_forward_padded.1} parent=1 // pred_fallthru
      _
    %1480 = vsyncpa [#allocation3], 1
    %1481 = vsyncpa [#allocation5], 1

</llo_original>
